<compile_context>
chip_gen: v6e
topology: v6e:2x2x1
jax: 0.10.0
libtpu: 0.0.40
codegen_flags: <defaults>
</compile_context>

<pallas_src>
import functools

import jax
import jax.numpy as jnp
from jax.experimental import pallas as pl
from jax.experimental.pallas import tpu as pltpu

HIDDEN = 192          # logical hidden size (matches nn.Linear(in, 192))
HIDDEN_PAD = 256      # lane-dense padded hidden size (2 full vregs)


def _round_up(x, m):
    return ((x + m - 1) // m) * m


def _mlp_kernel(x_ref, w1_ref, b1_ref, w2_ref, b2_ref, w3_ref, b3_ref, o_ref):
    # Fused 3-layer MLP per batch tile. Matmul operands are bf16 (MXU fast path),
    # accumulation / bias / ReLU are f32.
    x = x_ref[...]                                                         # bf16 (block_b, in_p)
    h = jnp.dot(x, w1_ref[...], preferred_element_type=jnp.float32) + b1_ref[...]
    h = jnp.maximum(h, 0.0).astype(jnp.bfloat16)
    h = jnp.dot(h, w2_ref[...], preferred_element_type=jnp.float32) + b2_ref[...]
    h = jnp.maximum(h, 0.0).astype(jnp.bfloat16)
    y = jnp.dot(h, w3_ref[...], preferred_element_type=jnp.float32) + b3_ref[...]
    o_ref[...] = y.astype(o_ref.dtype)


@functools.partial(jax.jit, static_argnames=("block_b",))
def mlp_forward(x, w1, b1, w2, b2, w3, b3, *, block_b=512):
    """x: (B, in_dim) f32.  w*: (fan_in, fan_out) f32, b*: (1, fan_out) f32.

    Equivalent to PyTorch: linear3(relu(linear2(relu(linear1(x))))).
    """
    B, in_dim = x.shape
    out_dim = w3.shape[1]

    in_p = _round_up(in_dim, 128)
    out_p = _round_up(out_dim, 128)
    b_p = _round_up(B, block_b)

    f32 = jnp.float32
    bf16 = jnp.bfloat16

    # --- pad (zero) + cast: exact for Linear+ReLU stacks -------------------
    x_p = jnp.zeros((b_p, in_p), bf16).at[:B, :in_dim].set(x.astype(bf16))

    w1_p = jnp.zeros((in_p, HIDDEN_PAD), bf16).at[:in_dim, :HIDDEN].set(w1.astype(bf16))
    b1_p = jnp.zeros((1, HIDDEN_PAD), f32).at[:, :HIDDEN].set(b1.astype(f32))

    w2_p = jnp.zeros((HIDDEN_PAD, HIDDEN_PAD), bf16).at[:HIDDEN, :HIDDEN].set(w2.astype(bf16))
    b2_p = jnp.zeros((1, HIDDEN_PAD), f32).at[:, :HIDDEN].set(b2.astype(f32))

    w3_p = jnp.zeros((HIDDEN_PAD, out_p), bf16).at[:HIDDEN, :out_dim].set(w3.astype(bf16))
    b3_p = jnp.zeros((1, out_p), f32).at[:, :out_dim].set(b3.astype(f32))

    grid = (b_p // block_b,)

    flops = 2 * b_p * (in_p * HIDDEN_PAD + HIDDEN_PAD * HIDDEN_PAD + HIDDEN_PAD * out_p)
    bytes_accessed = (
        x_p.size * 2
        + (w1_p.size + w2_p.size + w3_p.size) * 2
        + (b1_p.size + b2_p.size + b3_p.size) * 4
        + b_p * out_p * 4
    )

    out_p_arr = pl.pallas_call(
        _mlp_kernel,
        out_shape=jax.ShapeDtypeStruct((b_p, out_p), f32),
        grid_spec=pltpu.PrefetchScalarGridSpec(
            num_scalar_prefetch=0,
            grid=grid,
            in_specs=[
                pl.BlockSpec((block_b, in_p), lambda i: (i, 0)),          # x tile over batch
                pl.BlockSpec((in_p, HIDDEN_PAD), lambda i: (0, 0)),       # W1 (resident)
                pl.BlockSpec((1, HIDDEN_PAD), lambda i: (0, 0)),          # b1
                pl.BlockSpec((HIDDEN_PAD, HIDDEN_PAD), lambda i: (0, 0)),  # W2 (resident)
                pl.BlockSpec((1, HIDDEN_PAD), lambda i: (0, 0)),          # b2
                pl.BlockSpec((HIDDEN_PAD, out_p), lambda i: (0, 0)),      # W3 (resident)
                pl.BlockSpec((1, out_p), lambda i: (0, 0)),               # b3
            ],
            out_specs=pl.BlockSpec((block_b, out_p), lambda i: (i, 0)),
        ),
        compiler_params=pltpu.CompilerParams(
            dimension_semantics=("parallel",),
        ),
        cost_estimate=pl.CostEstimate(
            flops=flops, transcendentals=0, bytes_accessed=bytes_accessed
        ),
    )(x_p, w1_p, b1_p, w2_p, b2_p, w3_p, b3_p)

    return out_p_arr[:B, :out_dim]


def init_linear(key, fan_in, fan_out):
    """Mimics torch.nn.Linear default init: U(-1/sqrt(fan_in), 1/sqrt(fan_in))."""
    kw, kb = jax.random.split(key)
    bound = 1.0 / jnp.sqrt(jnp.float32(fan_in))
    w = jax.random.uniform(kw, (fan_in, fan_out), jnp.float32, -bound, bound)
    b = jax.random.uniform(kb, (1, fan_out), jnp.float32, -bound, bound)
    return w, b


def reference_forward_bf16(x, w1, b1, w2, b2, w3, b3):
    """Pure-JAX reference with the same bf16-operand / f32-accumulate numerics."""
    bf16, f32 = jnp.bfloat16, jnp.float32
    h = jnp.dot(x.astype(bf16), w1.astype(bf16), preferred_element_type=f32) + b1
    h = jnp.maximum(h, 0.0).astype(bf16)
    h = jnp.dot(h, w2.astype(bf16), preferred_element_type=f32) + b2
    h = jnp.maximum(h, 0.0).astype(bf16)
    return jnp.dot(h, w3.astype(bf16), preferred_element_type=f32) + b3


if __name__ == "__main__":
    batch, in_dim, out_dim = 8, 32, 8

    key = jax.random.PRNGKey(0)
    kx, k1, k2, k3 = jax.random.split(key, 4)

    x = jax.random.normal(kx, (batch, in_dim), jnp.float32)
    w1, b1 = init_linear(k1, in_dim, HIDDEN)
    w2, b2 = init_linear(k2, HIDDEN, HIDDEN)
    w3, b3 = init_linear(k3, HIDDEN, out_dim)

    out = mlp_forward(x, w1, b1, w2, b2, w3, b3)
    out = jax.block_until_ready(out)

    ref = reference_forward_bf16(x, w1, b1, w2, b2, w3, b3)
    assert out.shape == (batch, out_dim)
    assert jnp.allclose(out, ref, atol=1e-2, rtol=1e-2), "mismatch vs reference"

    print("KERNEL_OK")
</pallas_src>

<mosaic_0001>
module attributes {stable_mosaic.version = 11 : i64} {
  func.func @_mlp_kernel(%arg0: i32, %arg1: memref<512x128xbf16, #tpu.memory_space<vmem>>, %arg2: memref<128x256xbf16, #tpu.memory_space<vmem>>, %arg3: memref<1x256xf32, #tpu.memory_space<vmem>>, %arg4: memref<256x256xbf16, #tpu.memory_space<vmem>>, %arg5: memref<1x256xf32, #tpu.memory_space<vmem>>, %arg6: memref<256x128xbf16, #tpu.memory_space<vmem>>, %arg7: memref<1x128xf32, #tpu.memory_space<vmem>>, %arg8: memref<512x128xf32, #tpu.memory_space<vmem>>) attributes {dimension_semantics = [#tpu.dimension_semantics<parallel>], iteration_bounds = array<i64: 1>, scalar_prefetch = 0 : i64, scratch_operands = 0 : i64, tpu.core_type = #tpu.core_type<tc>, window_params = [{transform_indices = @transform_0, window_bounds = array<i64: 512, 128>}, {pipeline_mode = #tpu.pipeline_mode<synchronous>, transform_indices = @transform_1, window_bounds = array<i64: 128, 256>}, {pipeline_mode = #tpu.pipeline_mode<synchronous>, transform_indices = @transform_2, window_bounds = array<i64: 1, 256>}, {pipeline_mode = #tpu.pipeline_mode<synchronous>, transform_indices = @transform_3, window_bounds = array<i64: 256, 256>}, {pipeline_mode = #tpu.pipeline_mode<synchronous>, transform_indices = @transform_4, window_bounds = array<i64: 1, 256>}, {pipeline_mode = #tpu.pipeline_mode<synchronous>, transform_indices = @transform_5, window_bounds = array<i64: 256, 128>}, {pipeline_mode = #tpu.pipeline_mode<synchronous>, transform_indices = @transform_6, window_bounds = array<i64: 1, 128>}, {transform_indices = @transform_7, window_bounds = array<i64: 512, 128>}]} {
    %c0 = arith.constant 0 : index
    %c0_0 = arith.constant 0 : index
    %0 = vector.load %arg1[%c0, %c0_0] : memref<512x128xbf16, #tpu.memory_space<vmem>>, vector<512x128xbf16>
    %c0_1 = arith.constant 0 : index
    %c0_2 = arith.constant 0 : index
    %1 = vector.load %arg2[%c0_1, %c0_2] : memref<128x256xbf16, #tpu.memory_space<vmem>>, vector<128x256xbf16>
    %cst = arith.constant dense<0.000000e+00> : vector<512x256xf32>
    %2 = tpu.matmul %0, %1, %cst {dimension_numbers = #tpu.dot_dimension_numbers<[1], [0], [0], [1], [0, 0, 1, 1], [], []>} : vector<512x128xbf16>, vector<128x256xbf16>, vector<512x256xf32> -> vector<512x256xf32>
    %c0_3 = arith.constant 0 : index
    %c0_4 = arith.constant 0 : index
    %3 = vector.load %arg3[%c0_3, %c0_4] : memref<1x256xf32, #tpu.memory_space<vmem>>, vector<1x256xf32>
    %4 = vector.broadcast %3 : vector<1x256xf32> to vector<512x256xf32>
    %5 = arith.addf %2, %4 : vector<512x256xf32>
    %cst_5 = arith.constant 0.000000e+00 : f32
    %6 = vector.broadcast %cst_5 : f32 to vector<512x256xf32>
    %7 = arith.maximumf %5, %6 : vector<512x256xf32>
    %8 = arith.truncf %7 : vector<512x256xf32> to vector<512x256xbf16>
    %c0_6 = arith.constant 0 : index
    %c0_7 = arith.constant 0 : index
    %9 = vector.load %arg4[%c0_6, %c0_7] : memref<256x256xbf16, #tpu.memory_space<vmem>>, vector<256x256xbf16>
    %cst_8 = arith.constant dense<0.000000e+00> : vector<512x256xf32>
    %10 = tpu.matmul %8, %9, %cst_8 {dimension_numbers = #tpu.dot_dimension_numbers<[1], [0], [0], [1], [0, 0, 1, 1], [], []>} : vector<512x256xbf16>, vector<256x256xbf16>, vector<512x256xf32> -> vector<512x256xf32>
    %c0_9 = arith.constant 0 : index
    %c0_10 = arith.constant 0 : index
    %11 = vector.load %arg5[%c0_9, %c0_10] : memref<1x256xf32, #tpu.memory_space<vmem>>, vector<1x256xf32>
    %12 = vector.broadcast %11 : vector<1x256xf32> to vector<512x256xf32>
    %13 = arith.addf %10, %12 : vector<512x256xf32>
    %cst_11 = arith.constant 0.000000e+00 : f32
    %14 = vector.broadcast %cst_11 : f32 to vector<512x256xf32>
    %15 = arith.maximumf %13, %14 : vector<512x256xf32>
    %16 = arith.truncf %15 : vector<512x256xf32> to vector<512x256xbf16>
    %c0_12 = arith.constant 0 : index
    %c0_13 = arith.constant 0 : index
    %17 = vector.load %arg6[%c0_12, %c0_13] : memref<256x128xbf16, #tpu.memory_space<vmem>>, vector<256x128xbf16>
    %cst_14 = arith.constant dense<0.000000e+00> : vector<512x128xf32>
    %18 = tpu.matmul %16, %17, %cst_14 {dimension_numbers = #tpu.dot_dimension_numbers<[1], [0], [0], [1], [0, 0, 1, 1], [], []>} : vector<512x256xbf16>, vector<256x128xbf16>, vector<512x128xf32> -> vector<512x128xf32>
    %c0_15 = arith.constant 0 : index
    %c0_16 = arith.constant 0 : index
    %19 = vector.load %arg7[%c0_15, %c0_16] : memref<1x128xf32, #tpu.memory_space<vmem>>, vector<1x128xf32>
    %20 = vector.broadcast %19 : vector<1x128xf32> to vector<512x128xf32>
    %21 = arith.addf %18, %20 : vector<512x128xf32>
    %c0_17 = arith.constant 0 : index
    %c0_18 = arith.constant 0 : index
    %22 = vector.load %arg8[%c0_17, %c0_18] : memref<512x128xf32, #tpu.memory_space<vmem>>, vector<512x128xf32>
    tpu.vector_store %arg8[%c0_17, %c0_18], %21 {strides = array<i32>} : memref<512x128xf32, #tpu.memory_space<vmem>>, vector<512x128xf32>,
    return
  }
  func.func @transform_0(%arg0: i32) -> (i32, i32) {
    %c0_i32 = arith.constant 0 : i32
    %c0_i32_0 = arith.constant 0 : i32
    return %arg0, %c0_i32 : i32, i32
  }
  func.func @transform_1(%arg0: i32) -> (i32, i32) {
    %c0_i32 = arith.constant 0 : i32
    %c0_i32_0 = arith.constant 0 : i32
    %c0_i32_1 = arith.constant 0 : i32
    return %c0_i32, %c0_i32_0 : i32, i32
  }
  func.func @transform_2(%arg0: i32) -> (i32, i32) {
    %c0_i32 = arith.constant 0 : i32
    %c0_i32_0 = arith.constant 0 : i32
    %c0_i32_1 = arith.constant 0 : i32
    return %c0_i32, %c0_i32_0 : i32, i32
  }
  func.func @transform_3(%arg0: i32) -> (i32, i32) {
    %c0_i32 = arith.constant 0 : i32
    %c0_i32_0 = arith.constant 0 : i32
    %c0_i32_1 = arith.constant 0 : i32
    return %c0_i32, %c0_i32_0 : i32, i32
  }
  func.func @transform_4(%arg0: i32) -> (i32, i32) {
    %c0_i32 = arith.constant 0 : i32
    %c0_i32_0 = arith.constant 0 : i32
    %c0_i32_1 = arith.constant 0 : i32
    return %c0_i32, %c0_i32_0 : i32, i32
  }
  func.func @transform_5(%arg0: i32) -> (i32, i32) {
    %c0_i32 = arith.constant 0 : i32
    %c0_i32_0 = arith.constant 0 : i32
    %c0_i32_1 = arith.constant 0 : i32
    return %c0_i32, %c0_i32_0 : i32, i32
  }
  func.func @transform_6(%arg0: i32) -> (i32, i32) {
    %c0_i32 = arith.constant 0 : i32
    %c0_i32_0 = arith.constant 0 : i32
    %c0_i32_1 = arith.constant 0 : i32
    return %c0_i32, %c0_i32_0 : i32, i32
  }
  func.func @transform_7(%arg0: i32) -> (i32, i32) {
    %c0_i32 = arith.constant 0 : i32
    %c0_i32_0 = arith.constant 0 : i32
    return %arg0, %c0_i32 : i32, i32
  }
}

</mosaic_0001>

<llo_original>
// kernel: mlp_forward.1
$region0: #{mlp_forward.1}
  #allocation0 [shape = 'u32[]', space=smem, size = 0x4, offset = 0x4, fixed_abs, tag = 'smem constant byte address 0x4 - core index']
  #allocation1 [shape = 'u32[144,128]{1,0:T(1,128)}', space=vmem, size = 0x12000, scoped, tag = 'internal scratch']
  %s0 = inlined_call_operand.vmem [shape: bf16[512,128], index: 0, kind: input, shape index: {}]
  %s1 = inlined_call_operand.vmem [shape: bf16[128,256], index: 1, kind: input, shape index: {}]
  %s2 = inlined_call_operand.vmem [shape: f32[1,256], index: 2, kind: input, shape index: {}]
  %s3 = inlined_call_operand.vmem [shape: bf16[256,256], index: 3, kind: input, shape index: {}]
  %s4 = inlined_call_operand.vmem [shape: f32[1,256], index: 4, kind: input, shape index: {}]
  %s5 = inlined_call_operand.vmem [shape: bf16[256,128], index: 5, kind: input, shape index: {}]
  %s6 = inlined_call_operand.vmem [shape: f32[1,128], index: 6, kind: input, shape index: {}]
  %s7 = inlined_call_operand.vmem [shape: f32[512,128], index: 7, kind: output, shape index: {}]
  %s8 = sld [smem:[#allocation0]]
  $region38: #{mlp_forward.1} parent=0
    _
  %s10 = ssub.s32 1, %s8
  %s11 = scalar_select 0, %s10, %s8
  // Predicated region
  $region2: #{mlp_forward.1} parent=0 // pred_check
    _
  $region3: #{mlp_forward.1} parent=0 // pred_check_branch
    %13 = sbr.rel (0) target = $region5
  $region4: #{mlp_forward.1} parent=0 // pred_region
    _
  $region5: #{mlp_forward.1} parent=0 // pred_fallthru
    _
  // Predicated region
  $region6: #{mlp_forward.1} parent=0 // pred_check
    _
  $region7: #{mlp_forward.1} parent=0 // pred_check_branch
    %15 = sbr.rel (0) target = $region9
  $region8: #{mlp_forward.1} parent=0 // pred_region
    _
  $region9: #{mlp_forward.1} parent=0 // pred_fallthru
    _
  // Predicated region
  $region10: #{mlp_forward.1} parent=0 // pred_check
    _
  $region11: #{mlp_forward.1} parent=0 // pred_check_branch
    %17 = sbr.rel (0) target = $region13
  $region12: #{mlp_forward.1} parent=0 // pred_region
    _
  $region13: #{mlp_forward.1} parent=0 // pred_fallthru
    _
  // Predicated region
  $region14: #{mlp_forward.1} parent=0 // pred_check
    _
  $region15: #{mlp_forward.1} parent=0 // pred_check_branch
    %19 = sbr.rel (0) target = $region17
  $region16: #{mlp_forward.1} parent=0 // pred_region
    _
  $region17: #{mlp_forward.1} parent=0 // pred_fallthru
    _
  // Predicated region
  $region18: #{mlp_forward.1} parent=0 // pred_check
    _
  $region19: #{mlp_forward.1} parent=0 // pred_check_branch
    %21 = sbr.rel (0) target = $region21
  $region20: #{mlp_forward.1} parent=0 // pred_region
    _
  $region21: #{mlp_forward.1} parent=0 // pred_fallthru
    _
  // Predicated region
  $region22: #{mlp_forward.1} parent=0 // pred_check
    _
  $region23: #{mlp_forward.1} parent=0 // pred_check_branch
    %23 = sbr.rel (0) target = $region25
  $region24: #{mlp_forward.1} parent=0 // pred_region
    _
  $region25: #{mlp_forward.1} parent=0 // pred_fallthru
    _
  // Predicated region
  $region26: #{mlp_forward.1} parent=0 // pred_check
    _
  $region27: #{mlp_forward.1} parent=0 // pred_check_branch
    %25 = sbr.rel (0) target = $region29
  $region28: #{mlp_forward.1} parent=0 // pred_region
    _
  $region29: #{mlp_forward.1} parent=0 // pred_fallthru
    _
  %v27 = vld [vmem:[%s0] sm:$0xf]
  %v28 = vld [vmem:[%s0 + $0x4] sm:$0xf]
  %v29 = vld [vmem:[%s0 + $0x8] sm:$0xf]
  %v30 = vld [vmem:[%s0 + $0xc] sm:$0xf]
  %v31 = vld [vmem:[%s0 + $0x10] sm:$0xf]
  %v32 = vld [vmem:[%s0 + $0x14] sm:$0xf]
  %v33 = vld [vmem:[%s0 + $0x18] sm:$0xf]
  %v34 = vld [vmem:[%s0 + $0x1c] sm:$0xf]
  %v35 = vld [vmem:[%s0 + $0x20] sm:$0xf]
  %v36 = vld [vmem:[%s0 + $0x24] sm:$0xf]
  %v37 = vld [vmem:[%s0 + $0x28] sm:$0xf]
  %v38 = vld [vmem:[%s0 + $0x2c] sm:$0xf]
  %v39 = vld [vmem:[%s0 + $0x30] sm:$0xf]
  %v40 = vld [vmem:[%s0 + $0x34] sm:$0xf]
  %v41 = vld [vmem:[%s0 + $0x38] sm:$0xf]
  %v42 = vld [vmem:[%s0 + $0x3c] sm:$0xf]
  %v43 = vld [vmem:[%s0 + $0x40] sm:$0xf]
  %v44 = vld [vmem:[%s0 + $0x44] sm:$0xf]
  %v45 = vld [vmem:[%s0 + $0x48] sm:$0xf]
  %v46 = vld [vmem:[%s0 + $0x4c] sm:$0xf]
  %v47 = vld [vmem:[%s0 + $0x50] sm:$0xf]
  %v48 = vld [vmem:[%s0 + $0x54] sm:$0xf]
  %v49 = vld [vmem:[%s0 + $0x58] sm:$0xf]
  %v50 = vld [vmem:[%s0 + $0x5c] sm:$0xf]
  %v51 = vld [vmem:[%s0 + $0x60] sm:$0xf]
  %v52 = vld [vmem:[%s0 + $0x64] sm:$0xf]
  %v53 = vld [vmem:[%s0 + $0x68] sm:$0xf]
  %v54 = vld [vmem:[%s0 + $0x6c] sm:$0xf]
  %v55 = vld [vmem:[%s0 + $0x70] sm:$0xf]
  %v56 = vld [vmem:[%s0 + $0x74] sm:$0xf]
  %v57 = vld [vmem:[%s0 + $0x78] sm:$0xf]
  %v58 = vld [vmem:[%s0 + $0x7c] sm:$0xf]
  %v59 = vld [vmem:[%s0 + $0x80] sm:$0xf]
  %v60 = vld [vmem:[%s0 + $0x84] sm:$0xf]
  %v61 = vld [vmem:[%s0 + $0x88] sm:$0xf]
  %v62 = vld [vmem:[%s0 + $0x8c] sm:$0xf]
  %v63 = vld [vmem:[%s0 + $0x90] sm:$0xf]
  %v64 = vld [vmem:[%s0 + $0x94] sm:$0xf]
  %v65 = vld [vmem:[%s0 + $0x98] sm:$0xf]
  %v66 = vld [vmem:[%s0 + $0x9c] sm:$0xf]
  %v67 = vld [vmem:[%s0 + $0xa0] sm:$0xf]
  %v68 = vld [vmem:[%s0 + $0xa4] sm:$0xf]
  %v69 = vld [vmem:[%s0 + $0xa8] sm:$0xf]
  %v70 = vld [vmem:[%s0 + $0xac] sm:$0xf]
  %v71 = vld [vmem:[%s0 + $0xb0] sm:$0xf]
  %v72 = vld [vmem:[%s0 + $0xb4] sm:$0xf]
  %v73 = vld [vmem:[%s0 + $0xb8] sm:$0xf]
  %v74 = vld [vmem:[%s0 + $0xbc] sm:$0xf]
  %v75 = vld [vmem:[%s0 + $0xc0] sm:$0xf]
  %v76 = vld [vmem:[%s0 + $0xc4] sm:$0xf]
  %v77 = vld [vmem:[%s0 + $0xc8] sm:$0xf]
  %v78 = vld [vmem:[%s0 + $0xcc] sm:$0xf]
  %v79 = vld [vmem:[%s0 + $0xd0] sm:$0xf]
  %v80 = vld [vmem:[%s0 + $0xd4] sm:$0xf]
  %v81 = vld [vmem:[%s0 + $0xd8] sm:$0xf]
  %v82 = vld [vmem:[%s0 + $0xdc] sm:$0xf]
  %v83 = vld [vmem:[%s0 + $0xe0] sm:$0xf]
  %v84 = vld [vmem:[%s0 + $0xe4] sm:$0xf]
  %v85 = vld [vmem:[%s0 + $0xe8] sm:$0xf]
  %v86 = vld [vmem:[%s0 + $0xec] sm:$0xf]
  %v87 = vld [vmem:[%s0 + $0xf0] sm:$0xf]
  %v88 = vld [vmem:[%s0 + $0xf4] sm:$0xf]
  %v89 = vld [vmem:[%s0 + $0xf8] sm:$0xf]
  %v90 = vld [vmem:[%s0 + $0xfc] sm:$0xf]
  %v91 = vld [vmem:[%s1] sm:$0xff]
  %v92 = vld [vmem:[%s1 + $0x8] sm:$0xff]
  %v93 = vld [vmem:[%s1 + $0x10] sm:$0xff]
  %v94 = vld [vmem:[%s1 + $0x18] sm:$0xff]
  %v95 = vld [vmem:[%s1 + $0x20] sm:$0xff]
  %v96 = vld [vmem:[%s1 + $0x28] sm:$0xff]
  %v97 = vld [vmem:[%s1 + $0x30] sm:$0xff]
  %v98 = vld [vmem:[%s1 + $0x38] sm:$0xff]
  %v99 = vld [vmem:[%s1 + $0x40] sm:$0xff]
  %v100 = vld [vmem:[%s1 + $0x48] sm:$0xff]
  %v101 = vld [vmem:[%s1 + $0x50] sm:$0xff]
  %v102 = vld [vmem:[%s1 + $0x58] sm:$0xff]
  %v103 = vld [vmem:[%s1 + $0x60] sm:$0xff]
  %v104 = vld [vmem:[%s1 + $0x68] sm:$0xff]
  %v105 = vld [vmem:[%s1 + $0x70] sm:$0xff]
  %v106 = vld [vmem:[%s1 + $0x78] sm:$0xff]
  %v107 = vld [vmem:[%s2] sm:$0x3]
  %v109 = vlaneseq
  %v110 = vshrl.u32 %v109, 7
  %v111 = vsub.s32 0, %v110
  %v112 = vrot.slane %v107, %v111
  %v113 = vlaneseq
  %v114 = vshrl.u32 %v113, 7
  %v115 = vsub.s32 1, %v114
  %v116 = vrot.slane %v107, %v115
  %v183 = vunpack.c.l.b16 %v27
  %v184 = vunpack.c.l.b16 %v28
  %v185 = vunpack.c.l.b16 %v29
  %v186 = vunpack.c.l.b16 %v30
  %v187 = vunpack.c.l.b16 %v31
  %v188 = vunpack.c.l.b16 %v32
  %v189 = vunpack.c.l.b16 %v33
  %v190 = vunpack.c.l.b16 %v34
  %v191 = vunpack.c.l.b16 %v35
  %v192 = vunpack.c.l.b16 %v36
  %v193 = vunpack.c.l.b16 %v37
  %v194 = vunpack.c.l.b16 %v38
  %v195 = vunpack.c.l.b16 %v39
  %v196 = vunpack.c.l.b16 %v40
  %v197 = vunpack.c.l.b16 %v41
  %v198 = vunpack.c.l.b16 %v42
  %v199 = vunpack.c.l.b16 %v43
  %v200 = vunpack.c.l.b16 %v44
  %v201 = vunpack.c.l.b16 %v45
  %v202 = vunpack.c.l.b16 %v46
  %v203 = vunpack.c.l.b16 %v47
  %v204 = vunpack.c.l.b16 %v48
  %v205 = vunpack.c.l.b16 %v49
  %v206 = vunpack.c.l.b16 %v50
  %v207 = vunpack.c.l.b16 %v51
  %v208 = vunpack.c.l.b16 %v52
  %v209 = vunpack.c.l.b16 %v53
  %v210 = vunpack.c.l.b16 %v54
  %v211 = vunpack.c.l.b16 %v55
  %v212 = vunpack.c.l.b16 %v56
  %v213 = vunpack.c.l.b16 %v57
  %v214 = vunpack.c.l.b16 %v58
  %v215 = vunpack.c.l.b16 %v59
  %v216 = vunpack.c.l.b16 %v60
  %v217 = vunpack.c.l.b16 %v61
  %v218 = vunpack.c.l.b16 %v62
  %v219 = vunpack.c.l.b16 %v63
  %v220 = vunpack.c.l.b16 %v64
  %v221 = vunpack.c.l.b16 %v65
  %v222 = vunpack.c.l.b16 %v66
  %v223 = vunpack.c.l.b16 %v67
  %v224 = vunpack.c.l.b16 %v68
  %v225 = vunpack.c.l.b16 %v69
  %v226 = vunpack.c.l.b16 %v70
  %v227 = vunpack.c.l.b16 %v71
  %v228 = vunpack.c.l.b16 %v72
  %v229 = vunpack.c.l.b16 %v73
  %v230 = vunpack.c.l.b16 %v74
  %v231 = vunpack.c.l.b16 %v75
  %v232 = vunpack.c.l.b16 %v76
  %v233 = vunpack.c.l.b16 %v77
  %v234 = vunpack.c.l.b16 %v78
  %v235 = vunpack.c.l.b16 %v79
  %v236 = vunpack.c.l.b16 %v80
  %v237 = vunpack.c.l.b16 %v81
  %v238 = vunpack.c.l.b16 %v82
  %v239 = vunpack.c.l.b16 %v83
  %v240 = vunpack.c.l.b16 %v84
  %v241 = vunpack.c.l.b16 %v85
  %v242 = vunpack.c.l.b16 %v86
  %v243 = vunpack.c.l.b16 %v87
  %v244 = vunpack.c.l.b16 %v88
  %v245 = vunpack.c.l.b16 %v89
  %v246 = vunpack.c.l.b16 %v90
  %v247 = vpack.c.b16 %v184, %v183
  %v248 = vpack.c.b16 %v186, %v185
  %v249 = vpack.c.b16 %v188, %v187
  %v250 = vpack.c.b16 %v190, %v189
  %v251 = vpack.c.b16 %v192, %v191
  %v252 = vpack.c.b16 %v194, %v193
  %v253 = vpack.c.b16 %v196, %v195
  %v254 = vpack.c.b16 %v198, %v197
  %v255 = vpack.c.b16 %v200, %v199
  %v256 = vpack.c.b16 %v202, %v201
  %v257 = vpack.c.b16 %v204, %v203
  %v258 = vpack.c.b16 %v206, %v205
  %v259 = vpack.c.b16 %v208, %v207
  %v260 = vpack.c.b16 %v210, %v209
  %v261 = vpack.c.b16 %v212, %v211
  %v262 = vpack.c.b16 %v214, %v213
  %v263 = vpack.c.b16 %v216, %v215
  %v264 = vpack.c.b16 %v218, %v217
  %v265 = vpack.c.b16 %v220, %v219
  %v266 = vpack.c.b16 %v222, %v221
  %v267 = vpack.c.b16 %v224, %v223
  %v268 = vpack.c.b16 %v226, %v225
  %v269 = vpack.c.b16 %v228, %v227
  %v270 = vpack.c.b16 %v230, %v229
  %v271 = vpack.c.b16 %v232, %v231
  %v272 = vpack.c.b16 %v234, %v233
  %v273 = vpack.c.b16 %v236, %v235
  %v274 = vpack.c.b16 %v238, %v237
  %v275 = vpack.c.b16 %v240, %v239
  %v276 = vpack.c.b16 %v242, %v241
  %v277 = vpack.c.b16 %v244, %v243
  %v278 = vpack.c.b16 %v246, %v245
  %v327 = vunpack.c.l.b16 %v91
  %v328 = vunpack.c.h.b16 %v91
  %v329 = vunpack.c.l.b16 %v92
  %v330 = vunpack.c.h.b16 %v92
  %v331 = vunpack.c.l.b16 %v93
  %v332 = vunpack.c.h.b16 %v93
  %v333 = vunpack.c.l.b16 %v94
  %v334 = vunpack.c.h.b16 %v94
  %v335 = vunpack.c.l.b16 %v95
  %v336 = vunpack.c.h.b16 %v95
  %v337 = vunpack.c.l.b16 %v96
  %v338 = vunpack.c.h.b16 %v96
  %v339 = vunpack.c.l.b16 %v97
  %v340 = vunpack.c.h.b16 %v97
  %v341 = vunpack.c.l.b16 %v98
  %v342 = vunpack.c.h.b16 %v98
  %v343 = vunpack.c.l.b16 %v99
  %v344 = vunpack.c.h.b16 %v99
  %v345 = vunpack.c.l.b16 %v100
  %v346 = vunpack.c.h.b16 %v100
  %v347 = vunpack.c.l.b16 %v101
  %v348 = vunpack.c.h.b16 %v101
  %v349 = vunpack.c.l.b16 %v102
  %v350 = vunpack.c.h.b16 %v102
  %v351 = vunpack.c.l.b16 %v103
  %v352 = vunpack.c.h.b16 %v103
  %v353 = vunpack.c.l.b16 %v104
  %v354 = vunpack.c.h.b16 %v104
  %v355 = vunpack.c.l.b16 %v105
  %v356 = vunpack.c.h.b16 %v105
  %v357 = vunpack.c.l.b16 %v106
  %v358 = vunpack.c.h.b16 %v106
  %v359 = vpack.c.b16 %v329, %v327
  %v360 = vpack.c.b16 %v330, %v328
  %v361 = vpack.c.b16 %v333, %v331
  %v362 = vpack.c.b16 %v334, %v332
  %v363 = vpack.c.b16 %v337, %v335
  %v364 = vpack.c.b16 %v338, %v336
  %v365 = vpack.c.b16 %v341, %v339
  %v366 = vpack.c.b16 %v342, %v340
  %v367 = vpack.c.b16 %v345, %v343
  %v368 = vpack.c.b16 %v346, %v344
  %v369 = vpack.c.b16 %v349, %v347
  %v370 = vpack.c.b16 %v350, %v348
  %v371 = vpack.c.b16 %v353, %v351
  %v372 = vpack.c.b16 %v354, %v352
  %v373 = vpack.c.b16 %v357, %v355
  %v374 = vpack.c.b16 %v358, %v356
  %391 = vmatprep.subr.bf16.mxu0 %v374
  %392 = vmatpush1.bf16.msra.mxu0 %v373
  %393 = vmatprep.subr.bf16.mxu0 %v372
  %394 = vmatpush1.bf16.msra.mxu0 %v371
  %395 = vmatprep.subr.bf16.mxu0 %v370
  %396 = vmatpush1.bf16.msra.mxu0 %v369
  %397 = vmatprep.subr.bf16.mxu0 %v368
  %398 = vmatpush1.bf16.msra.mxu0 %v367
  %399 = vmatprep.subr.bf16.mxu0 %v366
  %400 = vmatpush1.bf16.msra.mxu0 %v365
  %401 = vmatprep.subr.bf16.mxu0 %v364
  %402 = vmatpush1.bf16.msra.mxu0 %v363
  %403 = vmatprep.subr.bf16.mxu0 %v362
  %404 = vmatpush1.bf16.msra.mxu0 %v361
  %405 = vmatprep.subr.bf16.mxu0 %v360
  %406 = vmatpush1.bf16.msra.mxu0 %v359
  %407 = vmatprep.subr.bf16.mxu0 0
  %408 = vmatpush2.bf16.msra.mxu0 0
  %409 = vmatprep.subr.bf16.mxu0 0
  %410 = vmatpush2.bf16.msra.mxu0 0
  %411 = vmatprep.subr.bf16.mxu0 0
  %412 = vmatpush2.bf16.msra.mxu0 0
  %413 = vmatprep.subr.bf16.mxu0 0
  %414 = vmatpush2.bf16.msra.mxu0 0
  %415 = vmatprep.subr.bf16.mxu0 0
  %416 = vmatpush2.bf16.msra.mxu0 0
  %417 = vmatprep.subr.bf16.mxu0 0
  %418 = vmatpush2.bf16.msra.mxu0 0
  %419 = vmatprep.subr.bf16.mxu0 0
  %420 = vmatpush2.bf16.msra.mxu0 0
  %421 = vmatprep.subr.bf16.mxu0 0
  %422 = vmatpush2.bf16.msra.mxu0 0
  %423 = vmatprep.mubr.bf16.mxu0 0
  %424 = vmatmul.mubr.bf16.gmra.mxu0 %v247
  %v425 = vpop.f32.mrf.mxu0
  %v426 = vadd.f32 %v112, %v425
  %v427 = vpop.f32.mrf.mxu0
  %v428 = vadd.f32 %v116, %v427
  %v429 = vpop.f32.mrf.mxu0
  %v430 = vadd.f32 %v112, %v429
  %v431 = vpop.f32.mrf.mxu0
  %v432 = vadd.f32 %v116, %v431
  %433 = vmatprep.mubr.bf16.mxu0 0
  %434 = vmatmul.mubr.bf16.gmra.mxu0 %v248
  %v435 = vpop.f32.mrf.mxu0
  %v436 = vadd.f32 %v112, %v435
  %v437 = vpop.f32.mrf.mxu0
  %v438 = vadd.f32 %v116, %v437
  %v439 = vpop.f32.mrf.mxu0
  %v440 = vadd.f32 %v112, %v439
  %v441 = vpop.f32.mrf.mxu0
  %v442 = vadd.f32 %v116, %v441
  %443 = vmatprep.mubr.bf16.mxu0 0
  %444 = vmatmul.mubr.bf16.gmra.mxu0 %v249
  %v445 = vpop.f32.mrf.mxu0
  %v446 = vadd.f32 %v112, %v445
  %v447 = vpop.f32.mrf.mxu0
  %v448 = vadd.f32 %v116, %v447
  %v449 = vpop.f32.mrf.mxu0
  %v450 = vadd.f32 %v112, %v449
  %v451 = vpop.f32.mrf.mxu0
  %v452 = vadd.f32 %v116, %v451
  %453 = vmatprep.mubr.bf16.mxu0 0
  %454 = vmatmul.mubr.bf16.gmra.mxu0 %v250
  %v455 = vpop.f32.mrf.mxu0
  %v456 = vadd.f32 %v112, %v455
  %v457 = vpop.f32.mrf.mxu0
  %v458 = vadd.f32 %v116, %v457
  %v459 = vpop.f32.mrf.mxu0
  %v460 = vadd.f32 %v112, %v459
  %v461 = vpop.f32.mrf.mxu0
  %v462 = vadd.f32 %v116, %v461
  %463 = vmatprep.mubr.bf16.mxu0 0
  %464 = vmatmul.mubr.bf16.gmra.mxu0 %v251
  %v465 = vpop.f32.mrf.mxu0
  %v466 = vadd.f32 %v112, %v465
  %v467 = vpop.f32.mrf.mxu0
  %v468 = vadd.f32 %v116, %v467
  %v469 = vpop.f32.mrf.mxu0
  %v470 = vadd.f32 %v112, %v469
  %v471 = vpop.f32.mrf.mxu0
  %v472 = vadd.f32 %v116, %v471
  %473 = vmatprep.mubr.bf16.mxu0 0
  %474 = vmatmul.mubr.bf16.gmra.mxu0 %v252
  %v475 = vpop.f32.mrf.mxu0
  %v476 = vadd.f32 %v112, %v475
  %v477 = vpop.f32.mrf.mxu0
  %v478 = vadd.f32 %v116, %v477
  %v479 = vpop.f32.mrf.mxu0
  %v480 = vadd.f32 %v112, %v479
  %v481 = vpop.f32.mrf.mxu0
  %v482 = vadd.f32 %v116, %v481
  %483 = vmatprep.mubr.bf16.mxu0 0
  %484 = vmatmul.mubr.bf16.gmra.mxu0 %v253
  %v485 = vpop.f32.mrf.mxu0
  %v486 = vadd.f32 %v112, %v485
  %v487 = vpop.f32.mrf.mxu0
  %v488 = vadd.f32 %v116, %v487
  %v489 = vpop.f32.mrf.mxu0
  %v490 = vadd.f32 %v112, %v489
  %v491 = vpop.f32.mrf.mxu0
  %v492 = vadd.f32 %v116, %v491
  %493 = vmatprep.mubr.bf16.mxu0 0
  %494 = vmatmul.mubr.bf16.gmra.mxu0 %v254
  %v495 = vpop.f32.mrf.mxu0
  %v496 = vadd.f32 %v112, %v495
  %v497 = vpop.f32.mrf.mxu0
  %v498 = vadd.f32 %v116, %v497
  %v499 = vpop.f32.mrf.mxu0
  %v500 = vadd.f32 %v112, %v499
  %v501 = vpop.f32.mrf.mxu0
  %v502 = vadd.f32 %v116, %v501
  %503 = vmatprep.mubr.bf16.mxu0 0
  %504 = vmatmul.mubr.bf16.gmra.mxu0 %v255
  %v505 = vpop.f32.mrf.mxu0
  %v506 = vadd.f32 %v112, %v505
  %v507 = vpop.f32.mrf.mxu0
  %v508 = vadd.f32 %v116, %v507
  %v509 = vpop.f32.mrf.mxu0
  %v510 = vadd.f32 %v112, %v509
  %v511 = vpop.f32.mrf.mxu0
  %v512 = vadd.f32 %v116, %v511
  %513 = vmatprep.mubr.bf16.mxu0 0
  %514 = vmatmul.mubr.bf16.gmra.mxu0 %v256
  %v515 = vpop.f32.mrf.mxu0
  %v516 = vadd.f32 %v112, %v515
  %v517 = vpop.f32.mrf.mxu0
  %v518 = vadd.f32 %v116, %v517
  %v519 = vpop.f32.mrf.mxu0
  %v520 = vadd.f32 %v112, %v519
  %v521 = vpop.f32.mrf.mxu0
  %v522 = vadd.f32 %v116, %v521
  %523 = vmatprep.mubr.bf16.mxu0 0
  %524 = vmatmul.mubr.bf16.gmra.mxu0 %v257
  %v525 = vpop.f32.mrf.mxu0
  %v526 = vadd.f32 %v112, %v525
  %v527 = vpop.f32.mrf.mxu0
  %v528 = vadd.f32 %v116, %v527
  %v529 = vpop.f32.mrf.mxu0
  %v530 = vadd.f32 %v112, %v529
  %v531 = vpop.f32.mrf.mxu0
  %v532 = vadd.f32 %v116, %v531
  %533 = vmatprep.mubr.bf16.mxu0 0
  %534 = vmatmul.mubr.bf16.gmra.mxu0 %v258
  %v535 = vpop.f32.mrf.mxu0
  %v536 = vadd.f32 %v112, %v535
  %v537 = vpop.f32.mrf.mxu0
  %v538 = vadd.f32 %v116, %v537
  %v539 = vpop.f32.mrf.mxu0
  %v540 = vadd.f32 %v112, %v539
  %v541 = vpop.f32.mrf.mxu0
  %v542 = vadd.f32 %v116, %v541
  %543 = vmatprep.mubr.bf16.mxu0 0
  %544 = vmatmul.mubr.bf16.gmra.mxu0 %v259
  %v545 = vpop.f32.mrf.mxu0
  %v546 = vadd.f32 %v112, %v545
  %v547 = vpop.f32.mrf.mxu0
  %v548 = vadd.f32 %v116, %v547
  %v549 = vpop.f32.mrf.mxu0
  %v550 = vadd.f32 %v112, %v549
  %v551 = vpop.f32.mrf.mxu0
  %v552 = vadd.f32 %v116, %v551
  %553 = vmatprep.mubr.bf16.mxu0 0
  %554 = vmatmul.mubr.bf16.gmra.mxu0 %v260
  %v555 = vpop.f32.mrf.mxu0
  %v556 = vadd.f32 %v112, %v555
  %v557 = vpop.f32.mrf.mxu0
  %v558 = vadd.f32 %v116, %v557
  %v559 = vpop.f32.mrf.mxu0
  %v560 = vadd.f32 %v112, %v559
  %v561 = vpop.f32.mrf.mxu0
  %v562 = vadd.f32 %v116, %v561
  %563 = vmatprep.mubr.bf16.mxu0 0
  %564 = vmatmul.mubr.bf16.gmra.mxu0 %v261
  %v565 = vpop.f32.mrf.mxu0
  %v566 = vadd.f32 %v112, %v565
  %v567 = vpop.f32.mrf.mxu0
  %v568 = vadd.f32 %v116, %v567
  %v569 = vpop.f32.mrf.mxu0
  %v570 = vadd.f32 %v112, %v569
  %v571 = vpop.f32.mrf.mxu0
  %v572 = vadd.f32 %v116, %v571
  %573 = vmatprep.mubr.bf16.mxu0 0
  %574 = vmatmul.mubr.bf16.gmra.mxu0 %v262
  %v575 = vpop.f32.mrf.mxu0
  %v576 = vadd.f32 %v112, %v575
  %v577 = vpop.f32.mrf.mxu0
  %v578 = vadd.f32 %v116, %v577
  %v579 = vpop.f32.mrf.mxu0
  %v580 = vadd.f32 %v112, %v579
  %v581 = vpop.f32.mrf.mxu0
  %v582 = vadd.f32 %v116, %v581
  %583 = vmatprep.mubr.bf16.mxu0 0
  %584 = vmatmul.mubr.bf16.gmra.mxu0 %v263
  %v585 = vpop.f32.mrf.mxu0
  %v586 = vadd.f32 %v112, %v585
  %v587 = vpop.f32.mrf.mxu0
  %v588 = vadd.f32 %v116, %v587
  %v589 = vpop.f32.mrf.mxu0
  %v590 = vadd.f32 %v112, %v589
  %v591 = vpop.f32.mrf.mxu0
  %v592 = vadd.f32 %v116, %v591
  %593 = vmatprep.mubr.bf16.mxu0 0
  %594 = vmatmul.mubr.bf16.gmra.mxu0 %v264
  %v595 = vpop.f32.mrf.mxu0
  %v596 = vadd.f32 %v112, %v595
  %v597 = vpop.f32.mrf.mxu0
  %v598 = vadd.f32 %v116, %v597
  %v599 = vpop.f32.mrf.mxu0
  %v600 = vadd.f32 %v112, %v599
  %v601 = vpop.f32.mrf.mxu0
  %v602 = vadd.f32 %v116, %v601
  %603 = vmatprep.mubr.bf16.mxu0 0
  %604 = vmatmul.mubr.bf16.gmra.mxu0 %v265
  %v605 = vpop.f32.mrf.mxu0
  %v606 = vadd.f32 %v112, %v605
  %v607 = vpop.f32.mrf.mxu0
  %v608 = vadd.f32 %v116, %v607
  %v609 = vpop.f32.mrf.mxu0
  %v610 = vadd.f32 %v112, %v609
  %v611 = vpop.f32.mrf.mxu0
  %v612 = vadd.f32 %v116, %v611
  %613 = vmatprep.mubr.bf16.mxu0 0
  %614 = vmatmul.mubr.bf16.gmra.mxu0 %v266
  %v615 = vpop.f32.mrf.mxu0
  %v616 = vadd.f32 %v112, %v615
  %v617 = vpop.f32.mrf.mxu0
  %v618 = vadd.f32 %v116, %v617
  %v619 = vpop.f32.mrf.mxu0
  %v620 = vadd.f32 %v112, %v619
  %v621 = vpop.f32.mrf.mxu0
  %v622 = vadd.f32 %v116, %v621
  %623 = vmatprep.mubr.bf16.mxu0 0
  %624 = vmatmul.mubr.bf16.gmra.mxu0 %v267
  %v625 = vpop.f32.mrf.mxu0
  %v626 = vadd.f32 %v112, %v625
  %v627 = vpop.f32.mrf.mxu0
  %v628 = vadd.f32 %v116, %v627
  %v629 = vpop.f32.mrf.mxu0
  %v630 = vadd.f32 %v112, %v629
  %v631 = vpop.f32.mrf.mxu0
  %v632 = vadd.f32 %v116, %v631
  %633 = vmatprep.mubr.bf16.mxu0 0
  %634 = vmatmul.mubr.bf16.gmra.mxu0 %v268
  %v635 = vpop.f32.mrf.mxu0
  %v636 = vadd.f32 %v112, %v635
  %v637 = vpop.f32.mrf.mxu0
  %v638 = vadd.f32 %v116, %v637
  %v639 = vpop.f32.mrf.mxu0
  %v640 = vadd.f32 %v112, %v639
  %v641 = vpop.f32.mrf.mxu0
  %v642 = vadd.f32 %v116, %v641
  %643 = vmatprep.mubr.bf16.mxu0 0
  %644 = vmatmul.mubr.bf16.gmra.mxu0 %v269
  %v645 = vpop.f32.mrf.mxu0
  %v646 = vadd.f32 %v112, %v645
  %v647 = vpop.f32.mrf.mxu0
  %v648 = vadd.f32 %v116, %v647
  %v649 = vpop.f32.mrf.mxu0
  %v650 = vadd.f32 %v112, %v649
  %v651 = vpop.f32.mrf.mxu0
  %v652 = vadd.f32 %v116, %v651
  %653 = vmatprep.mubr.bf16.mxu0 0
  %654 = vmatmul.mubr.bf16.gmra.mxu0 %v270
  %v655 = vpop.f32.mrf.mxu0
  %v656 = vadd.f32 %v112, %v655
  %v657 = vpop.f32.mrf.mxu0
  %v658 = vadd.f32 %v116, %v657
  %v659 = vpop.f32.mrf.mxu0
  %v660 = vadd.f32 %v112, %v659
  %v661 = vpop.f32.mrf.mxu0
  %v662 = vadd.f32 %v116, %v661
  %663 = vmatprep.mubr.bf16.mxu0 0
  %664 = vmatmul.mubr.bf16.gmra.mxu0 %v271
  %v665 = vpop.f32.mrf.mxu0
  %v666 = vadd.f32 %v112, %v665
  %v667 = vpop.f32.mrf.mxu0
  %v668 = vadd.f32 %v116, %v667
  %v669 = vpop.f32.mrf.mxu0
  %v670 = vadd.f32 %v112, %v669
  %v671 = vpop.f32.mrf.mxu0
  %v672 = vadd.f32 %v116, %v671
  %673 = vmatprep.mubr.bf16.mxu0 0
  %674 = vmatmul.mubr.bf16.gmra.mxu0 %v272
  %v675 = vpop.f32.mrf.mxu0
  %v676 = vadd.f32 %v112, %v675
  %v677 = vpop.f32.mrf.mxu0
  %v678 = vadd.f32 %v116, %v677
  %v679 = vpop.f32.mrf.mxu0
  %v680 = vadd.f32 %v112, %v679
  %v681 = vpop.f32.mrf.mxu0
  %v682 = vadd.f32 %v116, %v681
  %683 = vmatprep.mubr.bf16.mxu0 0
  %684 = vmatmul.mubr.bf16.gmra.mxu0 %v273
  %v685 = vpop.f32.mrf.mxu0
  %v686 = vadd.f32 %v112, %v685
  %v687 = vpop.f32.mrf.mxu0
  %v688 = vadd.f32 %v116, %v687
  %v689 = vpop.f32.mrf.mxu0
  %v690 = vadd.f32 %v112, %v689
  %v691 = vpop.f32.mrf.mxu0
  %v692 = vadd.f32 %v116, %v691
  %693 = vmatprep.mubr.bf16.mxu0 0
  %694 = vmatmul.mubr.bf16.gmra.mxu0 %v274
  %v695 = vpop.f32.mrf.mxu0
  %v696 = vadd.f32 %v112, %v695
  %v697 = vpop.f32.mrf.mxu0
  %v698 = vadd.f32 %v116, %v697
  %v699 = vpop.f32.mrf.mxu0
  %v700 = vadd.f32 %v112, %v699
  %v701 = vpop.f32.mrf.mxu0
  %v702 = vadd.f32 %v116, %v701
  %703 = vmatprep.mubr.bf16.mxu0 0
  %704 = vmatmul.mubr.bf16.gmra.mxu0 %v275
  %v705 = vpop.f32.mrf.mxu0
  %v706 = vadd.f32 %v112, %v705
  %v707 = vpop.f32.mrf.mxu0
  %v708 = vadd.f32 %v116, %v707
  %v709 = vpop.f32.mrf.mxu0
  %v710 = vadd.f32 %v112, %v709
  %v711 = vpop.f32.mrf.mxu0
  %v712 = vadd.f32 %v116, %v711
  %713 = vmatprep.mubr.bf16.mxu0 0
  %714 = vmatmul.mubr.bf16.gmra.mxu0 %v276
  %v715 = vpop.f32.mrf.mxu0
  %v716 = vadd.f32 %v112, %v715
  %v717 = vpop.f32.mrf.mxu0
  %v718 = vadd.f32 %v116, %v717
  %v719 = vpop.f32.mrf.mxu0
  %v720 = vadd.f32 %v112, %v719
  %v721 = vpop.f32.mrf.mxu0
  %v722 = vadd.f32 %v116, %v721
  %723 = vmatprep.mubr.bf16.mxu0 0
  %724 = vmatmul.mubr.bf16.gmra.mxu0 %v277
  %v725 = vpop.f32.mrf.mxu0
  %v726 = vadd.f32 %v112, %v725
  %v727 = vpop.f32.mrf.mxu0
  %v728 = vadd.f32 %v116, %v727
  %v729 = vpop.f32.mrf.mxu0
  %v730 = vadd.f32 %v112, %v729
  %v731 = vpop.f32.mrf.mxu0
  %v732 = vadd.f32 %v116, %v731
  %733 = vmatprep.mubr.bf16.mxu0 0
  %734 = vmatmul.mubr.bf16.gmra.mxu0 %v278
  %v735 = vpop.f32.mrf.mxu0
  %v736 = vadd.f32 %v112, %v735
  %v737 = vpop.f32.mrf.mxu0
  %v738 = vadd.f32 %v116, %v737
  %v739 = vpop.f32.mrf.mxu0
  %v740 = vadd.f32 %v112, %v739
  %v741 = vpop.f32.mrf.mxu0
  %v742 = vadd.f32 %v116, %v741
  %743 = vdwg.mxu0
  %v744 = vmax.f32 %v426, 0.0
  %v745 = vmax.f32 %v428, 0.0
  %v746 = vmax.f32 %v430, 0.0
  %v747 = vmax.f32 %v432, 0.0
  %v748 = vmax.f32 %v436, 0.0
  %v749 = vmax.f32 %v438, 0.0
  %v750 = vmax.f32 %v440, 0.0
  %v751 = vmax.f32 %v442, 0.0
  %v752 = vmax.f32 %v446, 0.0
  %v753 = vmax.f32 %v448, 0.0
  %v754 = vmax.f32 %v450, 0.0
  %v755 = vmax.f32 %v452, 0.0
  %v756 = vmax.f32 %v456, 0.0
  %v757 = vmax.f32 %v458, 0.0
  %v758 = vmax.f32 %v460, 0.0
  %v759 = vmax.f32 %v462, 0.0
  %v760 = vmax.f32 %v466, 0.0
  %v761 = vmax.f32 %v468, 0.0
  %v762 = vmax.f32 %v470, 0.0
  %v763 = vmax.f32 %v472, 0.0
  %v764 = vmax.f32 %v476, 0.0
  %v765 = vmax.f32 %v478, 0.0
  %v766 = vmax.f32 %v480, 0.0
  %v767 = vmax.f32 %v482, 0.0
  %v768 = vmax.f32 %v486, 0.0
  %v769 = vmax.f32 %v488, 0.0
  %v770 = vmax.f32 %v490, 0.0
  %v771 = vmax.f32 %v492, 0.0
  %v772 = vmax.f32 %v496, 0.0
  %v773 = vmax.f32 %v498, 0.0
  %v774 = vmax.f32 %v500, 0.0
  %v775 = vmax.f32 %v502, 0.0
  %v776 = vmax.f32 %v506, 0.0
  %v777 = vmax.f32 %v508, 0.0
  %v778 = vmax.f32 %v510, 0.0
  %v779 = vmax.f32 %v512, 0.0
  %v780 = vmax.f32 %v516, 0.0
  %v781 = vmax.f32 %v518, 0.0
  %v782 = vmax.f32 %v520, 0.0
  %v783 = vmax.f32 %v522, 0.0
  %v784 = vmax.f32 %v526, 0.0
  %v785 = vmax.f32 %v528, 0.0
  %v786 = vmax.f32 %v530, 0.0
  %v787 = vmax.f32 %v532, 0.0
  %v788 = vmax.f32 %v536, 0.0
  %v789 = vmax.f32 %v538, 0.0
  %v790 = vmax.f32 %v540, 0.0
  %v791 = vmax.f32 %v542, 0.0
  %v792 = vmax.f32 %v546, 0.0
  %v793 = vmax.f32 %v548, 0.0
  %v794 = vmax.f32 %v550, 0.0
  %v795 = vmax.f32 %v552, 0.0
  %v796 = vmax.f32 %v556, 0.0
  %v797 = vmax.f32 %v558, 0.0
  %v798 = vmax.f32 %v560, 0.0
  %v799 = vmax.f32 %v562, 0.0
  %v800 = vmax.f32 %v566, 0.0
  %v801 = vmax.f32 %v568, 0.0
  %v802 = vmax.f32 %v570, 0.0
  %v803 = vmax.f32 %v572, 0.0
  %v804 = vmax.f32 %v576, 0.0
  %v805 = vmax.f32 %v578, 0.0
  %v806 = vmax.f32 %v580, 0.0
  %v807 = vmax.f32 %v582, 0.0
  %v808 = vmax.f32 %v586, 0.0
  %v809 = vmax.f32 %v588, 0.0
  %v810 = vmax.f32 %v590, 0.0
  %v811 = vmax.f32 %v592, 0.0
  %v812 = vmax.f32 %v596, 0.0
  %v813 = vmax.f32 %v598, 0.0
  %v814 = vmax.f32 %v600, 0.0
  %v815 = vmax.f32 %v602, 0.0
  %v816 = vmax.f32 %v606, 0.0
  %v817 = vmax.f32 %v608, 0.0
  %v818 = vmax.f32 %v610, 0.0
  %v819 = vmax.f32 %v612, 0.0
  %v820 = vmax.f32 %v616, 0.0
  %v821 = vmax.f32 %v618, 0.0
  %v822 = vmax.f32 %v620, 0.0
  %v823 = vmax.f32 %v622, 0.0
  %v824 = vmax.f32 %v626, 0.0
  %v825 = vmax.f32 %v628, 0.0
  %v826 = vmax.f32 %v630, 0.0
  %v827 = vmax.f32 %v632, 0.0
  %v828 = vmax.f32 %v636, 0.0
  %v829 = vmax.f32 %v638, 0.0
  %v830 = vmax.f32 %v640, 0.0
  %v831 = vmax.f32 %v642, 0.0
  %v832 = vmax.f32 %v646, 0.0
  %v833 = vmax.f32 %v648, 0.0
  %v834 = vmax.f32 %v650, 0.0
  %v835 = vmax.f32 %v652, 0.0
  %v836 = vmax.f32 %v656, 0.0
  %v837 = vmax.f32 %v658, 0.0
  %v838 = vmax.f32 %v660, 0.0
  %v839 = vmax.f32 %v662, 0.0
  %v840 = vmax.f32 %v666, 0.0
  %v841 = vmax.f32 %v668, 0.0
  %v842 = vmax.f32 %v670, 0.0
  %v843 = vmax.f32 %v672, 0.0
  %v844 = vmax.f32 %v676, 0.0
  %v845 = vmax.f32 %v678, 0.0
  %v846 = vmax.f32 %v680, 0.0
  %v847 = vmax.f32 %v682, 0.0
  %v848 = vmax.f32 %v686, 0.0
  %v849 = vmax.f32 %v688, 0.0
  %v850 = vmax.f32 %v690, 0.0
  %v851 = vmax.f32 %v692, 0.0
  %v852 = vmax.f32 %v696, 0.0
  %v853 = vmax.f32 %v698, 0.0
  %v854 = vmax.f32 %v700, 0.0
  %v855 = vmax.f32 %v702, 0.0
  %v856 = vmax.f32 %v706, 0.0
  %v857 = vmax.f32 %v708, 0.0
  %v858 = vmax.f32 %v710, 0.0
  %v859 = vmax.f32 %v712, 0.0
  %v860 = vmax.f32 %v716, 0.0
  %v861 = vmax.f32 %v718, 0.0
  %v862 = vmax.f32 %v720, 0.0
  %v863 = vmax.f32 %v722, 0.0
  %v864 = vmax.f32 %v726, 0.0
  %v865 = vmax.f32 %v728, 0.0
  %v866 = vmax.f32 %v730, 0.0
  %v867 = vmax.f32 %v732, 0.0
  %v868 = vmax.f32 %v736, 0.0
  %v869 = vmax.f32 %v738, 0.0
  %v870 = vmax.f32 %v740, 0.0
  %v871 = vmax.f32 %v742, 0.0
  %v872 = vpack.c.bf16 %v746, %v744
  %v873 = vpack.c.bf16 %v747, %v745
  %v874 = vpack.c.bf16 %v750, %v748
  %v875 = vpack.c.bf16 %v751, %v749
  %v876 = vpack.c.bf16 %v754, %v752
  %v877 = vpack.c.bf16 %v755, %v753
  %v878 = vpack.c.bf16 %v758, %v756
  %v879 = vpack.c.bf16 %v759, %v757
  %v880 = vpack.c.bf16 %v762, %v760
  %v881 = vpack.c.bf16 %v763, %v761
  %v882 = vpack.c.bf16 %v766, %v764
  %v883 = vpack.c.bf16 %v767, %v765
  %v884 = vpack.c.bf16 %v770, %v768
  %v885 = vpack.c.bf16 %v771, %v769
  %v886 = vpack.c.bf16 %v774, %v772
  %v887 = vpack.c.bf16 %v775, %v773
  %v888 = vpack.c.bf16 %v778, %v776
  %v889 = vpack.c.bf16 %v779, %v777
  %v890 = vpack.c.bf16 %v782, %v780
  %v891 = vpack.c.bf16 %v783, %v781
  %v892 = vpack.c.bf16 %v786, %v784
  %v893 = vpack.c.bf16 %v787, %v785
  %v894 = vpack.c.bf16 %v790, %v788
  %v895 = vpack.c.bf16 %v791, %v789
  %v896 = vpack.c.bf16 %v794, %v792
  %v897 = vpack.c.bf16 %v795, %v793
  %v898 = vpack.c.bf16 %v798, %v796
  %v899 = vpack.c.bf16 %v799, %v797
  %v900 = vpack.c.bf16 %v802, %v800
  %v901 = vpack.c.bf16 %v803, %v801
  %v902 = vpack.c.bf16 %v806, %v804
  %v903 = vpack.c.bf16 %v807, %v805
  %v904 = vpack.c.bf16 %v810, %v808
  %v905 = vpack.c.bf16 %v811, %v809
  %v906 = vpack.c.bf16 %v814, %v812
  %v907 = vpack.c.bf16 %v815, %v813
  %v908 = vpack.c.bf16 %v818, %v816
  %v909 = vpack.c.bf16 %v819, %v817
  %v910 = vpack.c.bf16 %v822, %v820
  %v911 = vpack.c.bf16 %v823, %v821
  %v912 = vpack.c.bf16 %v826, %v824
  %v913 = vpack.c.bf16 %v827, %v825
  %v914 = vpack.c.bf16 %v830, %v828
  %v915 = vpack.c.bf16 %v831, %v829
  %v916 = vpack.c.bf16 %v834, %v832
  %v917 = vpack.c.bf16 %v835, %v833
  %v918 = vpack.c.bf16 %v838, %v836
  %v919 = vpack.c.bf16 %v839, %v837
  %v920 = vpack.c.bf16 %v842, %v840
  %v921 = vpack.c.bf16 %v843, %v841
  %v922 = vpack.c.bf16 %v846, %v844
  %v923 = vpack.c.bf16 %v847, %v845
  %v924 = vpack.c.bf16 %v850, %v848
  %v925 = vpack.c.bf16 %v851, %v849
  %v926 = vpack.c.bf16 %v854, %v852
  %v927 = vpack.c.bf16 %v855, %v853
  %v928 = vpack.c.bf16 %v858, %v856
  %v929 = vpack.c.bf16 %v859, %v857
  %v930 = vpack.c.bf16 %v862, %v860
  %v931 = vpack.c.bf16 %v863, %v861
  %v932 = vpack.c.bf16 %v866, %v864
  %v933 = vpack.c.bf16 %v867, %v865
  %v934 = vpack.c.bf16 %v870, %v868
  %v935 = vpack.c.bf16 %v871, %v869
  %v936 = vld [vmem:[%s3] sm:$0xff]
  %v937 = vld [vmem:[%s3 + $0x8] sm:$0xff]
  %v938 = vld [vmem:[%s3 + $0x10] sm:$0xff]
  %v939 = vld [vmem:[%s3 + $0x18] sm:$0xff]
  %v940 = vld [vmem:[%s3 + $0x20] sm:$0xff]
  %v941 = vld [vmem:[%s3 + $0x28] sm:$0xff]
  %v942 = vld [vmem:[%s3 + $0x30] sm:$0xff]
  %v943 = vld [vmem:[%s3 + $0x38] sm:$0xff]
  %v944 = vld [vmem:[%s3 + $0x40] sm:$0xff]
  %v945 = vld [vmem:[%s3 + $0x48] sm:$0xff]
  %v946 = vld [vmem:[%s3 + $0x50] sm:$0xff]
  %v947 = vld [vmem:[%s3 + $0x58] sm:$0xff]
  %v948 = vld [vmem:[%s3 + $0x60] sm:$0xff]
  %v949 = vld [vmem:[%s3 + $0x68] sm:$0xff]
  %v950 = vld [vmem:[%s3 + $0x70] sm:$0xff]
  %v951 = vld [vmem:[%s3 + $0x78] sm:$0xff]
  %v952 = vld [vmem:[%s3 + $0x80] sm:$0xff]
  %v953 = vld [vmem:[%s3 + $0x88] sm:$0xff]
  %v954 = vld [vmem:[%s3 + $0x90] sm:$0xff]
  %v955 = vld [vmem:[%s3 + $0x98] sm:$0xff]
  %v956 = vld [vmem:[%s3 + $0xa0] sm:$0xff]
  %v957 = vld [vmem:[%s3 + $0xa8] sm:$0xff]
  %v958 = vld [vmem:[%s3 + $0xb0] sm:$0xff]
  %v959 = vld [vmem:[%s3 + $0xb8] sm:$0xff]
  %v960 = vld [vmem:[%s3 + $0xc0] sm:$0xff]
  %v961 = vld [vmem:[%s3 + $0xc8] sm:$0xff]
  %v962 = vld [vmem:[%s3 + $0xd0] sm:$0xff]
  %v963 = vld [vmem:[%s3 + $0xd8] sm:$0xff]
  %v964 = vld [vmem:[%s3 + $0xe0] sm:$0xff]
  %v965 = vld [vmem:[%s3 + $0xe8] sm:$0xff]
  %v966 = vld [vmem:[%s3 + $0xf0] sm:$0xff]
  %v967 = vld [vmem:[%s3 + $0xf8] sm:$0xff]
  %v968 = vld [vmem:[%s4] sm:$0x3]
  %v970 = vlaneseq
  %v971 = vshrl.u32 %v970, 7
  %v972 = vsub.s32 0, %v971
  %v973 = vrot.slane %v968, %v972
  %v974 = vlaneseq
  %v975 = vshrl.u32 %v974, 7
  %v976 = vsub.s32 1, %v975
  %v977 = vrot.slane %v968, %v976
  %v1012 = vunpack.c.l.b16 %v936
  %v1013 = vunpack.c.h.b16 %v936
  %v1014 = vunpack.c.l.b16 %v937
  %v1015 = vunpack.c.h.b16 %v937
  %v1016 = vunpack.c.l.b16 %v938
  %v1017 = vunpack.c.h.b16 %v938
  %v1018 = vunpack.c.l.b16 %v939
  %v1019 = vunpack.c.h.b16 %v939
  %v1020 = vunpack.c.l.b16 %v940
  %v1021 = vunpack.c.h.b16 %v940
  %v1022 = vunpack.c.l.b16 %v941
  %v1023 = vunpack.c.h.b16 %v941
  %v1024 = vunpack.c.l.b16 %v942
  %v1025 = vunpack.c.h.b16 %v942
  %v1026 = vunpack.c.l.b16 %v943
  %v1027 = vunpack.c.h.b16 %v943
  %v1028 = vunpack.c.l.b16 %v944
  %v1029 = vunpack.c.h.b16 %v944
  %v1030 = vunpack.c.l.b16 %v945
  %v1031 = vunpack.c.h.b16 %v945
  %v1032 = vunpack.c.l.b16 %v946
  %v1033 = vunpack.c.h.b16 %v946
  %v1034 = vunpack.c.l.b16 %v947
  %v1035 = vunpack.c.h.b16 %v947
  %v1036 = vunpack.c.l.b16 %v948
  %v1037 = vunpack.c.h.b16 %v948
  %v1038 = vunpack.c.l.b16 %v949
  %v1039 = vunpack.c.h.b16 %v949
  %v1040 = vunpack.c.l.b16 %v950
  %v1041 = vunpack.c.h.b16 %v950
  %v1042 = vunpack.c.l.b16 %v951
  %v1043 = vunpack.c.h.b16 %v951
  %v1044 = vunpack.c.l.b16 %v952
  %v1045 = vunpack.c.h.b16 %v952
  %v1046 = vunpack.c.l.b16 %v953
  %v1047 = vunpack.c.h.b16 %v953
  %v1048 = vunpack.c.l.b16 %v954
  %v1049 = vunpack.c.h.b16 %v954
  %v1050 = vunpack.c.l.b16 %v955
  %v1051 = vunpack.c.h.b16 %v955
  %v1052 = vunpack.c.l.b16 %v956
  %v1053 = vunpack.c.h.b16 %v956
  %v1054 = vunpack.c.l.b16 %v957
  %v1055 = vunpack.c.h.b16 %v957
  %v1056 = vunpack.c.l.b16 %v958
  %v1057 = vunpack.c.h.b16 %v958
  %v1058 = vunpack.c.l.b16 %v959
  %v1059 = vunpack.c.h.b16 %v959
  %v1060 = vunpack.c.l.b16 %v960
  %v1061 = vunpack.c.h.b16 %v960
  %v1062 = vunpack.c.l.b16 %v961
  %v1063 = vunpack.c.h.b16 %v961
  %v1064 = vunpack.c.l.b16 %v962
  %v1065 = vunpack.c.h.b16 %v962
  %v1066 = vunpack.c.l.b16 %v963
  %v1067 = vunpack.c.h.b16 %v963
  %v1068 = vunpack.c.l.b16 %v964
  %v1069 = vunpack.c.h.b16 %v964
  %v1070 = vunpack.c.l.b16 %v965
  %v1071 = vunpack.c.h.b16 %v965
  %v1072 = vunpack.c.l.b16 %v966
  %v1073 = vunpack.c.h.b16 %v966
  %v1074 = vunpack.c.l.b16 %v967
  %v1075 = vunpack.c.h.b16 %v967
  %v1076 = vpack.c.b16 %v1014, %v1012
  %v1077 = vpack.c.b16 %v1015, %v1013
  %v1078 = vpack.c.b16 %v1018, %v1016
  %v1079 = vpack.c.b16 %v1019, %v1017
  %v1080 = vpack.c.b16 %v1022, %v1020
  %v1081 = vpack.c.b16 %v1023, %v1021
  %v1082 = vpack.c.b16 %v1026, %v1024
  %v1083 = vpack.c.b16 %v1027, %v1025
  %v1084 = vpack.c.b16 %v1030, %v1028
  %v1085 = vpack.c.b16 %v1031, %v1029
  %v1086 = vpack.c.b16 %v1034, %v1032
  %v1087 = vpack.c.b16 %v1035, %v1033
  %v1088 = vpack.c.b16 %v1038, %v1036
  %v1089 = vpack.c.b16 %v1039, %v1037
  %v1090 = vpack.c.b16 %v1042, %v1040
  %v1091 = vpack.c.b16 %v1043, %v1041
  %v1092 = vpack.c.b16 %v1046, %v1044
  %v1093 = vpack.c.b16 %v1047, %v1045
  %v1094 = vpack.c.b16 %v1050, %v1048
  %v1095 = vpack.c.b16 %v1051, %v1049
  %v1096 = vpack.c.b16 %v1054, %v1052
  %v1097 = vpack.c.b16 %v1055, %v1053
  %v1098 = vpack.c.b16 %v1058, %v1056
  %v1099 = vpack.c.b16 %v1059, %v1057
  %v1100 = vpack.c.b16 %v1062, %v1060
  %v1101 = vpack.c.b16 %v1063, %v1061
  %v1102 = vpack.c.b16 %v1066, %v1064
  %v1103 = vpack.c.b16 %v1067, %v1065
  %v1104 = vpack.c.b16 %v1070, %v1068
  %v1105 = vpack.c.b16 %v1071, %v1069
  %v1106 = vpack.c.b16 %v1074, %v1072
  %v1107 = vpack.c.b16 %v1075, %v1073
  %1140 = vmatprep.subr.bf16.mxu0 %v1091
  %1141 = vmatpush1.bf16.msra.mxu0 %v1090
  %1142 = vmatprep.subr.bf16.mxu0 %v1089
  %1143 = vmatpush1.bf16.msra.mxu0 %v1088
  %1144 = vmatprep.subr.bf16.mxu0 %v1087
  %1145 = vmatpush1.bf16.msra.mxu0 %v1086
  %1146 = vmatprep.subr.bf16.mxu0 %v1085
  %1147 = vmatpush1.bf16.msra.mxu0 %v1084
  %1148 = vmatprep.subr.bf16.mxu0 %v1083
  %1149 = vmatpush1.bf16.msra.mxu0 %v1082
  %1150 = vmatprep.subr.bf16.mxu0 %v1081
  %1151 = vmatpush1.bf16.msra.mxu0 %v1080
  %1152 = vmatprep.subr.bf16.mxu0 %v1079
  %1153 = vmatpush1.bf16.msra.mxu0 %v1078
  %1154 = vmatprep.subr.bf16.mxu0 %v1077
  %1155 = vmatpush1.bf16.msra.mxu0 %v1076
  %1156 = vmatprep.subr.bf16.mxu0 %v1107
  %1157 = vmatpush2.bf16.msra.mxu0 %v1106
  %1158 = vmatprep.subr.bf16.mxu0 %v1105
  %1159 = vmatpush2.bf16.msra.mxu0 %v1104
  %1160 = vmatprep.subr.bf16.mxu0 %v1103
  %1161 = vmatpush2.bf16.msra.mxu0 %v1102
  %1162 = vmatprep.subr.bf16.mxu0 %v1101
  %1163 = vmatpush2.bf16.msra.mxu0 %v1100
  %1164 = vmatprep.subr.bf16.mxu0 %v1099
  %1165 = vmatpush2.bf16.msra.mxu0 %v1098
  %1166 = vmatprep.subr.bf16.mxu0 %v1097
  %1167 = vmatpush2.bf16.msra.mxu0 %v1096
  %1168 = vmatprep.subr.bf16.mxu0 %v1095
  %1169 = vmatpush2.bf16.msra.mxu0 %v1094
  %1170 = vmatprep.subr.bf16.mxu0 %v1093
  %1171 = vmatpush2.bf16.msra.mxu0 %v1092
  %1172 = vmatprep.mubr.bf16.mxu0 %v873
  %1173 = vmatmul.mubr.bf16.gmra.mxu0 %v872
  %v1174 = vpop.f32.mrf.mxu0
  %v1175 = vadd.f32 %v973, %v1174
  %v1176 = vpop.f32.mrf.mxu0
  %v1177 = vadd.f32 %v977, %v1176
  %v1178 = vpop.f32.mrf.mxu0
  %v1179 = vadd.f32 %v973, %v1178
  %v1180 = vpop.f32.mrf.mxu0
  %v1181 = vadd.f32 %v977, %v1180
  %1182 = vmatprep.mubr.bf16.mxu0 %v875
  %1183 = vmatmul.mubr.bf16.gmra.mxu0 %v874
  %v1184 = vpop.f32.mrf.mxu0
  %v1185 = vadd.f32 %v973, %v1184
  %v1186 = vpop.f32.mrf.mxu0
  %v1187 = vadd.f32 %v977, %v1186
  %v1188 = vpop.f32.mrf.mxu0
  %v1189 = vadd.f32 %v973, %v1188
  %v1190 = vpop.f32.mrf.mxu0
  %v1191 = vadd.f32 %v977, %v1190
  %1192 = vmatprep.mubr.bf16.mxu0 %v877
  %1193 = vmatmul.mubr.bf16.gmra.mxu0 %v876
  %v1194 = vpop.f32.mrf.mxu0
  %v1195 = vadd.f32 %v973, %v1194
  %v1196 = vpop.f32.mrf.mxu0
  %v1197 = vadd.f32 %v977, %v1196
  %v1198 = vpop.f32.mrf.mxu0
  %v1199 = vadd.f32 %v973, %v1198
  %v1200 = vpop.f32.mrf.mxu0
  %v1201 = vadd.f32 %v977, %v1200
  %1202 = vmatprep.mubr.bf16.mxu0 %v879
  %1203 = vmatmul.mubr.bf16.gmra.mxu0 %v878
  %v1204 = vpop.f32.mrf.mxu0
  %v1205 = vadd.f32 %v973, %v1204
  %v1206 = vpop.f32.mrf.mxu0
  %v1207 = vadd.f32 %v977, %v1206
  %v1208 = vpop.f32.mrf.mxu0
  %v1209 = vadd.f32 %v973, %v1208
  %v1210 = vpop.f32.mrf.mxu0
  %v1211 = vadd.f32 %v977, %v1210
  %1212 = vmatprep.mubr.bf16.mxu0 %v881
  %1213 = vmatmul.mubr.bf16.gmra.mxu0 %v880
  %v1214 = vpop.f32.mrf.mxu0
  %v1215 = vadd.f32 %v973, %v1214
  %v1216 = vpop.f32.mrf.mxu0
  %v1217 = vadd.f32 %v977, %v1216
  %v1218 = vpop.f32.mrf.mxu0
  %v1219 = vadd.f32 %v973, %v1218
  %v1220 = vpop.f32.mrf.mxu0
  %v1221 = vadd.f32 %v977, %v1220
  %1222 = vmatprep.mubr.bf16.mxu0 %v883
  %1223 = vmatmul.mubr.bf16.gmra.mxu0 %v882
  %v1224 = vpop.f32.mrf.mxu0
  %v1225 = vadd.f32 %v973, %v1224
  %v1226 = vpop.f32.mrf.mxu0
  %v1227 = vadd.f32 %v977, %v1226
  %v1228 = vpop.f32.mrf.mxu0
  %v1229 = vadd.f32 %v973, %v1228
  %v1230 = vpop.f32.mrf.mxu0
  %v1231 = vadd.f32 %v977, %v1230
  %1232 = vmatprep.mubr.bf16.mxu0 %v885
  %1233 = vmatmul.mubr.bf16.gmra.mxu0 %v884
  %v1234 = vpop.f32.mrf.mxu0
  %v1235 = vadd.f32 %v973, %v1234
  %v1236 = vpop.f32.mrf.mxu0
  %v1237 = vadd.f32 %v977, %v1236
  %v1238 = vpop.f32.mrf.mxu0
  %v1239 = vadd.f32 %v973, %v1238
  %v1240 = vpop.f32.mrf.mxu0
  %v1241 = vadd.f32 %v977, %v1240
  %1242 = vmatprep.mubr.bf16.mxu0 %v887
  %1243 = vmatmul.mubr.bf16.gmra.mxu0 %v886
  %v1244 = vpop.f32.mrf.mxu0
  %v1245 = vadd.f32 %v973, %v1244
  %v1246 = vpop.f32.mrf.mxu0
  %v1247 = vadd.f32 %v977, %v1246
  %v1248 = vpop.f32.mrf.mxu0
  %v1249 = vadd.f32 %v973, %v1248
  %v1250 = vpop.f32.mrf.mxu0
  %v1251 = vadd.f32 %v977, %v1250
  %1252 = vmatprep.mubr.bf16.mxu0 %v889
  %1253 = vmatmul.mubr.bf16.gmra.mxu0 %v888
  %v1254 = vpop.f32.mrf.mxu0
  %v1255 = vadd.f32 %v973, %v1254
  %v1256 = vpop.f32.mrf.mxu0
  %v1257 = vadd.f32 %v977, %v1256
  %v1258 = vpop.f32.mrf.mxu0
  %v1259 = vadd.f32 %v973, %v1258
  %v1260 = vpop.f32.mrf.mxu0
  %v1261 = vadd.f32 %v977, %v1260
  %1262 = vmatprep.mubr.bf16.mxu0 %v891
  %1263 = vmatmul.mubr.bf16.gmra.mxu0 %v890
  %v1264 = vpop.f32.mrf.mxu0
  %v1265 = vadd.f32 %v973, %v1264
  %v1266 = vpop.f32.mrf.mxu0
  %v1267 = vadd.f32 %v977, %v1266
  %v1268 = vpop.f32.mrf.mxu0
  %v1269 = vadd.f32 %v973, %v1268
  %v1270 = vpop.f32.mrf.mxu0
  %v1271 = vadd.f32 %v977, %v1270
  %1272 = vmatprep.mubr.bf16.mxu0 %v893
  %1273 = vmatmul.mubr.bf16.gmra.mxu0 %v892
  %v1274 = vpop.f32.mrf.mxu0
  %v1275 = vadd.f32 %v973, %v1274
  %v1276 = vpop.f32.mrf.mxu0
  %v1277 = vadd.f32 %v977, %v1276
  %v1278 = vpop.f32.mrf.mxu0
  %v1279 = vadd.f32 %v973, %v1278
  %v1280 = vpop.f32.mrf.mxu0
  %v1281 = vadd.f32 %v977, %v1280
  %1282 = vmatprep.mubr.bf16.mxu0 %v895
  %1283 = vmatmul.mubr.bf16.gmra.mxu0 %v894
  %v1284 = vpop.f32.mrf.mxu0
  %v1285 = vadd.f32 %v973, %v1284
  %v1286 = vpop.f32.mrf.mxu0
  %v1287 = vadd.f32 %v977, %v1286
  %v1288 = vpop.f32.mrf.mxu0
  %v1289 = vadd.f32 %v973, %v1288
  %v1290 = vpop.f32.mrf.mxu0
  %v1291 = vadd.f32 %v977, %v1290
  %1292 = vmatprep.mubr.bf16.mxu0 %v897
  %1293 = vmatmul.mubr.bf16.gmra.mxu0 %v896
  %v1294 = vpop.f32.mrf.mxu0
  %v1295 = vadd.f32 %v973, %v1294
  %v1296 = vpop.f32.mrf.mxu0
  %v1297 = vadd.f32 %v977, %v1296
  %v1298 = vpop.f32.mrf.mxu0
  %v1299 = vadd.f32 %v973, %v1298
  %v1300 = vpop.f32.mrf.mxu0
  %v1301 = vadd.f32 %v977, %v1300
  %1302 = vmatprep.mubr.bf16.mxu0 %v899
  %1303 = vmatmul.mubr.bf16.gmra.mxu0 %v898
  %v1304 = vpop.f32.mrf.mxu0
  %v1305 = vadd.f32 %v973, %v1304
  %v1306 = vpop.f32.mrf.mxu0
  %v1307 = vadd.f32 %v977, %v1306
  %v1308 = vpop.f32.mrf.mxu0
  %v1309 = vadd.f32 %v973, %v1308
  %v1310 = vpop.f32.mrf.mxu0
  %v1311 = vadd.f32 %v977, %v1310
  %1312 = vmatprep.mubr.bf16.mxu0 %v901
  %1313 = vmatmul.mubr.bf16.gmra.mxu0 %v900
  %v1314 = vpop.f32.mrf.mxu0
  %v1315 = vadd.f32 %v973, %v1314
  %v1316 = vpop.f32.mrf.mxu0
  %v1317 = vadd.f32 %v977, %v1316
  %v1318 = vpop.f32.mrf.mxu0
  %v1319 = vadd.f32 %v973, %v1318
  %v1320 = vpop.f32.mrf.mxu0
  %v1321 = vadd.f32 %v977, %v1320
  %1322 = vmatprep.mubr.bf16.mxu0 %v903
  %1323 = vmatmul.mubr.bf16.gmra.mxu0 %v902
  %v1324 = vpop.f32.mrf.mxu0
  %v1325 = vadd.f32 %v973, %v1324
  %v1326 = vpop.f32.mrf.mxu0
  %v1327 = vadd.f32 %v977, %v1326
  %v1328 = vpop.f32.mrf.mxu0
  %v1329 = vadd.f32 %v973, %v1328
  %v1330 = vpop.f32.mrf.mxu0
  %v1331 = vadd.f32 %v977, %v1330
  %1332 = vmatprep.mubr.bf16.mxu0 %v905
  %1333 = vmatmul.mubr.bf16.gmra.mxu0 %v904
  %v1334 = vpop.f32.mrf.mxu0
  %v1335 = vadd.f32 %v973, %v1334
  %v1336 = vpop.f32.mrf.mxu0
  %v1337 = vadd.f32 %v977, %v1336
  %v1338 = vpop.f32.mrf.mxu0
  %v1339 = vadd.f32 %v973, %v1338
  %v1340 = vpop.f32.mrf.mxu0
  %v1341 = vadd.f32 %v977, %v1340
  %1342 = vmatprep.mubr.bf16.mxu0 %v907
  %1343 = vmatmul.mubr.bf16.gmra.mxu0 %v906
  %v1344 = vpop.f32.mrf.mxu0
  %v1345 = vadd.f32 %v973, %v1344
  %v1346 = vpop.f32.mrf.mxu0
  %v1347 = vadd.f32 %v977, %v1346
  %v1348 = vpop.f32.mrf.mxu0
  %v1349 = vadd.f32 %v973, %v1348
  %v1350 = vpop.f32.mrf.mxu0
  %v1351 = vadd.f32 %v977, %v1350
  %1352 = vmatprep.mubr.bf16.mxu0 %v909
  %1353 = vmatmul.mubr.bf16.gmra.mxu0 %v908
  %v1354 = vpop.f32.mrf.mxu0
  %v1355 = vadd.f32 %v973, %v1354
  %v1356 = vpop.f32.mrf.mxu0
  %v1357 = vadd.f32 %v977, %v1356
  %v1358 = vpop.f32.mrf.mxu0
  %v1359 = vadd.f32 %v973, %v1358
  %v1360 = vpop.f32.mrf.mxu0
  %v1361 = vadd.f32 %v977, %v1360
  %1362 = vmatprep.mubr.bf16.mxu0 %v911
  %1363 = vmatmul.mubr.bf16.gmra.mxu0 %v910
  %v1364 = vpop.f32.mrf.mxu0
  %v1365 = vadd.f32 %v973, %v1364
  %v1366 = vpop.f32.mrf.mxu0
  %v1367 = vadd.f32 %v977, %v1366
  %v1368 = vpop.f32.mrf.mxu0
  %v1369 = vadd.f32 %v973, %v1368
  %v1370 = vpop.f32.mrf.mxu0
  %v1371 = vadd.f32 %v977, %v1370
  %1372 = vmatprep.mubr.bf16.mxu0 %v913
  %1373 = vmatmul.mubr.bf16.gmra.mxu0 %v912
  %v1374 = vpop.f32.mrf.mxu0
  %v1375 = vadd.f32 %v973, %v1374
  %v1376 = vpop.f32.mrf.mxu0
  %v1377 = vadd.f32 %v977, %v1376
  %v1378 = vpop.f32.mrf.mxu0
  %v1379 = vadd.f32 %v973, %v1378
  %v1380 = vpop.f32.mrf.mxu0
  %v1381 = vadd.f32 %v977, %v1380
  %1382 = vmatprep.mubr.bf16.mxu0 %v915
  %1383 = vmatmul.mubr.bf16.gmra.mxu0 %v914
  %v1384 = vpop.f32.mrf.mxu0
  %v1385 = vadd.f32 %v973, %v1384
  %v1386 = vpop.f32.mrf.mxu0
  %v1387 = vadd.f32 %v977, %v1386
  %v1388 = vpop.f32.mrf.mxu0
  %v1389 = vadd.f32 %v973, %v1388
  %v1390 = vpop.f32.mrf.mxu0
  %v1391 = vadd.f32 %v977, %v1390
  %1392 = vmatprep.mubr.bf16.mxu0 %v917
  %1393 = vmatmul.mubr.bf16.gmra.mxu0 %v916
  %v1394 = vpop.f32.mrf.mxu0
  %v1395 = vadd.f32 %v973, %v1394
  %v1396 = vpop.f32.mrf.mxu0
  %v1397 = vadd.f32 %v977, %v1396
  %v1398 = vpop.f32.mrf.mxu0
  %v1399 = vadd.f32 %v973, %v1398
  %v1400 = vpop.f32.mrf.mxu0
  %v1401 = vadd.f32 %v977, %v1400
  %1402 = vmatprep.mubr.bf16.mxu0 %v919
  %1403 = vmatmul.mubr.bf16.gmra.mxu0 %v918
  %v1404 = vpop.f32.mrf.mxu0
  %v1405 = vadd.f32 %v973, %v1404
  %v1406 = vpop.f32.mrf.mxu0
  %v1407 = vadd.f32 %v977, %v1406
  %v1408 = vpop.f32.mrf.mxu0
  %v1409 = vadd.f32 %v973, %v1408
  %v1410 = vpop.f32.mrf.mxu0
  %v1411 = vadd.f32 %v977, %v1410
  %1412 = vmatprep.mubr.bf16.mxu0 %v921
  %1413 = vmatmul.mubr.bf16.gmra.mxu0 %v920
  %v1414 = vpop.f32.mrf.mxu0
  %v1415 = vadd.f32 %v973, %v1414
  %v1416 = vpop.f32.mrf.mxu0
  %v1417 = vadd.f32 %v977, %v1416
  %v1418 = vpop.f32.mrf.mxu0
  %v1419 = vadd.f32 %v973, %v1418
  %v1420 = vpop.f32.mrf.mxu0
  %v1421 = vadd.f32 %v977, %v1420
  %1422 = vmatprep.mubr.bf16.mxu0 %v923
  %1423 = vmatmul.mubr.bf16.gmra.mxu0 %v922
  %v1424 = vpop.f32.mrf.mxu0
  %v1425 = vadd.f32 %v973, %v1424
  %v1426 = vpop.f32.mrf.mxu0
  %v1427 = vadd.f32 %v977, %v1426
  %v1428 = vpop.f32.mrf.mxu0
  %v1429 = vadd.f32 %v973, %v1428
  %v1430 = vpop.f32.mrf.mxu0
  %v1431 = vadd.f32 %v977, %v1430
  %1432 = vmatprep.mubr.bf16.mxu0 %v925
  %1433 = vmatmul.mubr.bf16.gmra.mxu0 %v924
  %v1434 = vpop.f32.mrf.mxu0
  %v1435 = vadd.f32 %v973, %v1434
  %v1436 = vpop.f32.mrf.mxu0
  %v1437 = vadd.f32 %v977, %v1436
  %v1438 = vpop.f32.mrf.mxu0
  %v1439 = vadd.f32 %v973, %v1438
  %v1440 = vpop.f32.mrf.mxu0
  %v1441 = vadd.f32 %v977, %v1440
  %1442 = vmatprep.mubr.bf16.mxu0 %v927
  %1443 = vmatmul.mubr.bf16.gmra.mxu0 %v926
  %v1444 = vpop.f32.mrf.mxu0
  %v1445 = vadd.f32 %v973, %v1444
  %v1446 = vpop.f32.mrf.mxu0
  %v1447 = vadd.f32 %v977, %v1446
  %v1448 = vpop.f32.mrf.mxu0
  %v1449 = vadd.f32 %v973, %v1448
  %v1450 = vpop.f32.mrf.mxu0
  %v1451 = vadd.f32 %v977, %v1450
  %1452 = vmatprep.mubr.bf16.mxu0 %v929
  %1453 = vmatmul.mubr.bf16.gmra.mxu0 %v928
  %v1454 = vpop.f32.mrf.mxu0
  %v1455 = vadd.f32 %v973, %v1454
  %v1456 = vpop.f32.mrf.mxu0
  %v1457 = vadd.f32 %v977, %v1456
  %v1458 = vpop.f32.mrf.mxu0
  %v1459 = vadd.f32 %v973, %v1458
  %v1460 = vpop.f32.mrf.mxu0
  %v1461 = vadd.f32 %v977, %v1460
  %1462 = vmatprep.mubr.bf16.mxu0 %v931
  %1463 = vmatmul.mubr.bf16.gmra.mxu0 %v930
  %v1464 = vpop.f32.mrf.mxu0
  %v1465 = vadd.f32 %v973, %v1464
  %v1466 = vpop.f32.mrf.mxu0
  %v1467 = vadd.f32 %v977, %v1466
  %v1468 = vpop.f32.mrf.mxu0
  %v1469 = vadd.f32 %v973, %v1468
  %v1470 = vpop.f32.mrf.mxu0
  %v1471 = vadd.f32 %v977, %v1470
  %1472 = vmatprep.mubr.bf16.mxu0 %v933
  %1473 = vmatmul.mubr.bf16.gmra.mxu0 %v932
  %v1474 = vpop.f32.mrf.mxu0
  %v1475 = vadd.f32 %v973, %v1474
  %v1476 = vpop.f32.mrf.mxu0
  %v1477 = vadd.f32 %v977, %v1476
  %v1478 = vpop.f32.mrf.mxu0
  %v1479 = vadd.f32 %v973, %v1478
  %v1480 = vpop.f32.mrf.mxu0
  %v1481 = vadd.f32 %v977, %v1480
  %1482 = vmatprep.mubr.bf16.mxu0 %v935
  %1483 = vmatmul.mubr.bf16.gmra.mxu0 %v934
  %v1484 = vpop.f32.mrf.mxu0
  %v1485 = vadd.f32 %v973, %v1484
  %v1486 = vpop.f32.mrf.mxu0
  %v1487 = vadd.f32 %v977, %v1486
  %v1488 = vpop.f32.mrf.mxu0
  %v1489 = vadd.f32 %v973, %v1488
  %v1490 = vpop.f32.mrf.mxu0
  %v1491 = vadd.f32 %v977, %v1490
  %1492 = vdwg.mxu0
  %v1493 = vmax.f32 %v1175, 0.0
  %v1494 = vmax.f32 %v1177, 0.0
  %v1495 = vmax.f32 %v1179, 0.0
  %v1496 = vmax.f32 %v1181, 0.0
  %v1497 = vmax.f32 %v1185, 0.0
  %v1498 = vmax.f32 %v1187, 0.0
  %v1499 = vmax.f32 %v1189, 0.0
  %v1500 = vmax.f32 %v1191, 0.0
  %v1501 = vmax.f32 %v1195, 0.0
  %v1502 = vmax.f32 %v1197, 0.0
  %v1503 = vmax.f32 %v1199, 0.0
  %v1504 = vmax.f32 %v1201, 0.0
  %v1505 = vmax.f32 %v1205, 0.0
  %v1506 = vmax.f32 %v1207, 0.0
  %v1507 = vmax.f32 %v1209, 0.0
  %v1508 = vmax.f32 %v1211, 0.0
  %v1509 = vmax.f32 %v1215, 0.0
  %v1510 = vmax.f32 %v1217, 0.0
  %v1511 = vmax.f32 %v1219, 0.0
  %v1512 = vmax.f32 %v1221, 0.0
  %v1513 = vmax.f32 %v1225, 0.0
  %v1514 = vmax.f32 %v1227, 0.0
  %v1515 = vmax.f32 %v1229, 0.0
  %v1516 = vmax.f32 %v1231, 0.0
  %v1517 = vmax.f32 %v1235, 0.0
  %v1518 = vmax.f32 %v1237, 0.0
  %v1519 = vmax.f32 %v1239, 0.0
  %v1520 = vmax.f32 %v1241, 0.0
  %v1521 = vmax.f32 %v1245, 0.0
  %v1522 = vmax.f32 %v1247, 0.0
  %v1523 = vmax.f32 %v1249, 0.0
  %v1524 = vmax.f32 %v1251, 0.0
  %v1525 = vmax.f32 %v1255, 0.0
  %v1526 = vmax.f32 %v1257, 0.0
  %v1527 = vmax.f32 %v1259, 0.0
  %v1528 = vmax.f32 %v1261, 0.0
  %v1529 = vmax.f32 %v1265, 0.0
  %v1530 = vmax.f32 %v1267, 0.0
  %v1531 = vmax.f32 %v1269, 0.0
  %v1532 = vmax.f32 %v1271, 0.0
  %v1533 = vmax.f32 %v1275, 0.0
  %v1534 = vmax.f32 %v1277, 0.0
  %v1535 = vmax.f32 %v1279, 0.0
  %v1536 = vmax.f32 %v1281, 0.0
  %v1537 = vmax.f32 %v1285, 0.0
  %v1538 = vmax.f32 %v1287, 0.0
  %v1539 = vmax.f32 %v1289, 0.0
  %v1540 = vmax.f32 %v1291, 0.0
  %v1541 = vmax.f32 %v1295, 0.0
  %v1542 = vmax.f32 %v1297, 0.0
  %v1543 = vmax.f32 %v1299, 0.0
  %v1544 = vmax.f32 %v1301, 0.0
  %v1545 = vmax.f32 %v1305, 0.0
  %v1546 = vmax.f32 %v1307, 0.0
  %v1547 = vmax.f32 %v1309, 0.0
  %v1548 = vmax.f32 %v1311, 0.0
  %v1549 = vmax.f32 %v1315, 0.0
  %v1550 = vmax.f32 %v1317, 0.0
  %v1551 = vmax.f32 %v1319, 0.0
  %v1552 = vmax.f32 %v1321, 0.0
  %v1553 = vmax.f32 %v1325, 0.0
  %v1554 = vmax.f32 %v1327, 0.0
  %v1555 = vmax.f32 %v1329, 0.0
  %v1556 = vmax.f32 %v1331, 0.0
  %v1557 = vmax.f32 %v1335, 0.0
  %v1558 = vmax.f32 %v1337, 0.0
  %v1559 = vmax.f32 %v1339, 0.0
  %v1560 = vmax.f32 %v1341, 0.0
  %v1561 = vmax.f32 %v1345, 0.0
  %v1562 = vmax.f32 %v1347, 0.0
  %v1563 = vmax.f32 %v1349, 0.0
  %v1564 = vmax.f32 %v1351, 0.0
  %v1565 = vmax.f32 %v1355, 0.0
  %v1566 = vmax.f32 %v1357, 0.0
  %v1567 = vmax.f32 %v1359, 0.0
  %v1568 = vmax.f32 %v1361, 0.0
  %v1569 = vmax.f32 %v1365, 0.0
  %v1570 = vmax.f32 %v1367, 0.0
  %v1571 = vmax.f32 %v1369, 0.0
  %v1572 = vmax.f32 %v1371, 0.0
  %v1573 = vmax.f32 %v1375, 0.0
  %v1574 = vmax.f32 %v1377, 0.0
  %v1575 = vmax.f32 %v1379, 0.0
  %v1576 = vmax.f32 %v1381, 0.0
  %v1577 = vmax.f32 %v1385, 0.0
  %v1578 = vmax.f32 %v1387, 0.0
  %v1579 = vmax.f32 %v1389, 0.0
  %v1580 = vmax.f32 %v1391, 0.0
  %v1581 = vmax.f32 %v1395, 0.0
  %v1582 = vmax.f32 %v1397, 0.0
  %v1583 = vmax.f32 %v1399, 0.0
  %v1584 = vmax.f32 %v1401, 0.0
  %v1585 = vmax.f32 %v1405, 0.0
  %v1586 = vmax.f32 %v1407, 0.0
  %v1587 = vmax.f32 %v1409, 0.0
  %v1588 = vmax.f32 %v1411, 0.0
  %v1589 = vmax.f32 %v1415, 0.0
  %v1590 = vmax.f32 %v1417, 0.0
  %v1591 = vmax.f32 %v1419, 0.0
  %v1592 = vmax.f32 %v1421, 0.0
  %v1593 = vmax.f32 %v1425, 0.0
  %v1594 = vmax.f32 %v1427, 0.0
  %v1595 = vmax.f32 %v1429, 0.0
  %v1596 = vmax.f32 %v1431, 0.0
  %v1597 = vmax.f32 %v1435, 0.0
  %v1598 = vmax.f32 %v1437, 0.0
  %v1599 = vmax.f32 %v1439, 0.0
  %v1600 = vmax.f32 %v1441, 0.0
  %v1601 = vmax.f32 %v1445, 0.0
  %v1602 = vmax.f32 %v1447, 0.0
  %v1603 = vmax.f32 %v1449, 0.0
  %v1604 = vmax.f32 %v1451, 0.0
  %v1605 = vmax.f32 %v1455, 0.0
  %v1606 = vmax.f32 %v1457, 0.0
  %v1607 = vmax.f32 %v1459, 0.0
  %v1608 = vmax.f32 %v1461, 0.0
  %v1609 = vmax.f32 %v1465, 0.0
  %v1610 = vmax.f32 %v1467, 0.0
  %v1611 = vmax.f32 %v1469, 0.0
  %v1612 = vmax.f32 %v1471, 0.0
  %v1613 = vmax.f32 %v1475, 0.0
  %v1614 = vmax.f32 %v1477, 0.0
  %v1615 = vmax.f32 %v1479, 0.0
  %v1616 = vmax.f32 %v1481, 0.0
  %v1617 = vmax.f32 %v1485, 0.0
  %v1618 = vmax.f32 %v1487, 0.0
  %v1619 = vmax.f32 %v1489, 0.0
  %v1620 = vmax.f32 %v1491, 0.0
  %v1621 = vpack.c.bf16 %v1495, %v1493
  %v1622 = vpack.c.bf16 %v1496, %v1494
  %v1623 = vpack.c.bf16 %v1499, %v1497
  %v1624 = vpack.c.bf16 %v1500, %v1498
  %v1625 = vpack.c.bf16 %v1503, %v1501
  %v1626 = vpack.c.bf16 %v1504, %v1502
  %v1627 = vpack.c.bf16 %v1507, %v1505
  %v1628 = vpack.c.bf16 %v1508, %v1506
  %v1629 = vpack.c.bf16 %v1511, %v1509
  %v1630 = vpack.c.bf16 %v1512, %v1510
  %v1631 = vpack.c.bf16 %v1515, %v1513
  %v1632 = vpack.c.bf16 %v1516, %v1514
  %v1633 = vpack.c.bf16 %v1519, %v1517
  %v1634 = vpack.c.bf16 %v1520, %v1518
  %v1635 = vpack.c.bf16 %v1523, %v1521
  %v1636 = vpack.c.bf16 %v1524, %v1522
  %v1637 = vpack.c.bf16 %v1527, %v1525
  %v1638 = vpack.c.bf16 %v1528, %v1526
  %v1639 = vpack.c.bf16 %v1531, %v1529
  %v1640 = vpack.c.bf16 %v1532, %v1530
  %v1641 = vpack.c.bf16 %v1535, %v1533
  %v1642 = vpack.c.bf16 %v1536, %v1534
  %v1643 = vpack.c.bf16 %v1539, %v1537
  %v1644 = vpack.c.bf16 %v1540, %v1538
  %v1645 = vpack.c.bf16 %v1543, %v1541
  %v1646 = vpack.c.bf16 %v1544, %v1542
  %v1647 = vpack.c.bf16 %v1547, %v1545
  %v1648 = vpack.c.bf16 %v1548, %v1546
  %v1649 = vpack.c.bf16 %v1551, %v1549
  %v1650 = vpack.c.bf16 %v1552, %v1550
  %v1651 = vpack.c.bf16 %v1555, %v1553
  %v1652 = vpack.c.bf16 %v1556, %v1554
  %v1653 = vpack.c.bf16 %v1559, %v1557
  %v1654 = vpack.c.bf16 %v1560, %v1558
  %v1655 = vpack.c.bf16 %v1563, %v1561
  %v1656 = vpack.c.bf16 %v1564, %v1562
  %v1657 = vpack.c.bf16 %v1567, %v1565
  %v1658 = vpack.c.bf16 %v1568, %v1566
  %v1659 = vpack.c.bf16 %v1571, %v1569
  %v1660 = vpack.c.bf16 %v1572, %v1570
  %v1661 = vpack.c.bf16 %v1575, %v1573
  %v1662 = vpack.c.bf16 %v1576, %v1574
  %v1663 = vpack.c.bf16 %v1579, %v1577
  %v1664 = vpack.c.bf16 %v1580, %v1578
  %v1665 = vpack.c.bf16 %v1583, %v1581
  %v1666 = vpack.c.bf16 %v1584, %v1582
  %v1667 = vpack.c.bf16 %v1587, %v1585
  %v1668 = vpack.c.bf16 %v1588, %v1586
  %v1669 = vpack.c.bf16 %v1591, %v1589
  %v1670 = vpack.c.bf16 %v1592, %v1590
  %v1671 = vpack.c.bf16 %v1595, %v1593
  %v1672 = vpack.c.bf16 %v1596, %v1594
  %v1673 = vpack.c.bf16 %v1599, %v1597
  %v1674 = vpack.c.bf16 %v1600, %v1598
  %v1675 = vpack.c.bf16 %v1603, %v1601
  %v1676 = vpack.c.bf16 %v1604, %v1602
  %v1677 = vpack.c.bf16 %v1607, %v1605
  %v1678 = vpack.c.bf16 %v1608, %v1606
  %v1679 = vpack.c.bf16 %v1611, %v1609
  %v1680 = vpack.c.bf16 %v1612, %v1610
  %v1681 = vpack.c.bf16 %v1615, %v1613
  %v1682 = vpack.c.bf16 %v1616, %v1614
  %v1683 = vpack.c.bf16 %v1619, %v1617
  %v1684 = vpack.c.bf16 %v1620, %v1618
  %v1685 = vld [vmem:[%s5] sm:$0xf]
  %v1686 = vld [vmem:[%s5 + $0x4] sm:$0xf]
  %v1687 = vld [vmem:[%s5 + $0x8] sm:$0xf]
  %v1688 = vld [vmem:[%s5 + $0xc] sm:$0xf]
  %v1689 = vld [vmem:[%s5 + $0x10] sm:$0xf]
  %v1690 = vld [vmem:[%s5 + $0x14] sm:$0xf]
  %v1691 = vld [vmem:[%s5 + $0x18] sm:$0xf]
  %v1692 = vld [vmem:[%s5 + $0x1c] sm:$0xf]
  %v1693 = vld [vmem:[%s5 + $0x20] sm:$0xf]
  %v1694 = vld [vmem:[%s5 + $0x24] sm:$0xf]
  %v1695 = vld [vmem:[%s5 + $0x28] sm:$0xf]
  %v1696 = vld [vmem:[%s5 + $0x2c] sm:$0xf]
  %v1697 = vld [vmem:[%s5 + $0x30] sm:$0xf]
  %v1698 = vld [vmem:[%s5 + $0x34] sm:$0xf]
  %v1699 = vld [vmem:[%s5 + $0x38] sm:$0xf]
  %v1700 = vld [vmem:[%s5 + $0x3c] sm:$0xf]
  %v1701 = vld [vmem:[%s5 + $0x40] sm:$0xf]
  %v1702 = vld [vmem:[%s5 + $0x44] sm:$0xf]
  %v1703 = vld [vmem:[%s5 + $0x48] sm:$0xf]
  %v1704 = vld [vmem:[%s5 + $0x4c] sm:$0xf]
  %v1705 = vld [vmem:[%s5 + $0x50] sm:$0xf]
  %v1706 = vld [vmem:[%s5 + $0x54] sm:$0xf]
  %v1707 = vld [vmem:[%s5 + $0x58] sm:$0xf]
  %v1708 = vld [vmem:[%s5 + $0x5c] sm:$0xf]
  %v1709 = vld [vmem:[%s5 + $0x60] sm:$0xf]
  %v1710 = vld [vmem:[%s5 + $0x64] sm:$0xf]
  %v1711 = vld [vmem:[%s5 + $0x68] sm:$0xf]
  %v1712 = vld [vmem:[%s5 + $0x6c] sm:$0xf]
  %v1713 = vld [vmem:[%s5 + $0x70] sm:$0xf]
  %v1714 = vld [vmem:[%s5 + $0x74] sm:$0xf]
  %v1715 = vld [vmem:[%s5 + $0x78] sm:$0xf]
  %v1716 = vld [vmem:[%s5 + $0x7c] sm:$0xf]
  %v1717 = vld [vmem:[%s6] sm:$0x1]
  %v1719 = vlaneseq
  %v1720 = vshrl.u32 %v1719, 7
  %v1721 = vsub.s32 0, %v1720
  %v1722 = vrot.slane %v1717, %v1721
  %v1756 = vunpack.c.l.b16 %v1685
  %v1757 = vunpack.c.l.b16 %v1686
  %v1758 = vunpack.c.l.b16 %v1687
  %v1759 = vunpack.c.l.b16 %v1688
  %v1760 = vunpack.c.l.b16 %v1689
  %v1761 = vunpack.c.l.b16 %v1690
  %v1762 = vunpack.c.l.b16 %v1691
  %v1763 = vunpack.c.l.b16 %v1692
  %v1764 = vunpack.c.l.b16 %v1693
  %v1765 = vunpack.c.l.b16 %v1694
  %v1766 = vunpack.c.l.b16 %v1695
  %v1767 = vunpack.c.l.b16 %v1696
  %v1768 = vunpack.c.l.b16 %v1697
  %v1769 = vunpack.c.l.b16 %v1698
  %v1770 = vunpack.c.l.b16 %v1699
  %v1771 = vunpack.c.l.b16 %v1700
  %v1772 = vunpack.c.l.b16 %v1701
  %v1773 = vunpack.c.l.b16 %v1702
  %v1774 = vunpack.c.l.b16 %v1703
  %v1775 = vunpack.c.l.b16 %v1704
  %v1776 = vunpack.c.l.b16 %v1705
  %v1777 = vunpack.c.l.b16 %v1706
  %v1778 = vunpack.c.l.b16 %v1707
  %v1779 = vunpack.c.l.b16 %v1708
  %v1780 = vunpack.c.l.b16 %v1709
  %v1781 = vunpack.c.l.b16 %v1710
  %v1782 = vunpack.c.l.b16 %v1711
  %v1783 = vunpack.c.l.b16 %v1712
  %v1784 = vunpack.c.l.b16 %v1713
  %v1785 = vunpack.c.l.b16 %v1714
  %v1786 = vunpack.c.l.b16 %v1715
  %v1787 = vunpack.c.l.b16 %v1716
  %v1788 = vpack.c.b16 %v1757, %v1756
  %v1789 = vpack.c.b16 %v1759, %v1758
  %v1790 = vpack.c.b16 %v1761, %v1760
  %v1791 = vpack.c.b16 %v1763, %v1762
  %v1792 = vpack.c.b16 %v1765, %v1764
  %v1793 = vpack.c.b16 %v1767, %v1766
  %v1794 = vpack.c.b16 %v1769, %v1768
  %v1795 = vpack.c.b16 %v1771, %v1770
  %v1796 = vpack.c.b16 %v1773, %v1772
  %v1797 = vpack.c.b16 %v1775, %v1774
  %v1798 = vpack.c.b16 %v1777, %v1776
  %v1799 = vpack.c.b16 %v1779, %v1778
  %v1800 = vpack.c.b16 %v1781, %v1780
  %v1801 = vpack.c.b16 %v1783, %v1782
  %v1802 = vpack.c.b16 %v1785, %v1784
  %v1803 = vpack.c.b16 %v1787, %v1786
  %1820 = vmatprep.subr.bf16.mxu0 0
  %1821 = vmatpush1.bf16.msra.mxu0 %v1795
  %1822 = vmatprep.subr.bf16.mxu0 0
  %1823 = vmatpush1.bf16.msra.mxu0 %v1794
  %1824 = vmatprep.subr.bf16.mxu0 0
  %1825 = vmatpush1.bf16.msra.mxu0 %v1793
  %1826 = vmatprep.subr.bf16.mxu0 0
  %1827 = vmatpush1.bf16.msra.mxu0 %v1792
  %1828 = vmatprep.subr.bf16.mxu0 0
  %1829 = vmatpush1.bf16.msra.mxu0 %v1791
  %1830 = vmatprep.subr.bf16.mxu0 0
  %1831 = vmatpush1.bf16.msra.mxu0 %v1790
  %1832 = vmatprep.subr.bf16.mxu0 0
  %1833 = vmatpush1.bf16.msra.mxu0 %v1789
  %1834 = vmatprep.subr.bf16.mxu0 0
  %1835 = vmatpush1.bf16.msra.mxu0 %v1788
  %1836 = vmatprep.subr.bf16.mxu0 0
  %1837 = vmatpush2.bf16.msra.mxu0 %v1803
  %1838 = vmatprep.subr.bf16.mxu0 0
  %1839 = vmatpush2.bf16.msra.mxu0 %v1802
  %1840 = vmatprep.subr.bf16.mxu0 0
  %1841 = vmatpush2.bf16.msra.mxu0 %v1801
  %1842 = vmatprep.subr.bf16.mxu0 0
  %1843 = vmatpush2.bf16.msra.mxu0 %v1800
  %1844 = vmatprep.subr.bf16.mxu0 0
  %1845 = vmatpush2.bf16.msra.mxu0 %v1799
  %1846 = vmatprep.subr.bf16.mxu0 0
  %1847 = vmatpush2.bf16.msra.mxu0 %v1798
  %1848 = vmatprep.subr.bf16.mxu0 0
  %1849 = vmatpush2.bf16.msra.mxu0 %v1797
  %1850 = vmatprep.subr.bf16.mxu0 0
  %1851 = vmatpush2.bf16.msra.mxu0 %v1796
  %1852 = vmatprep.mubr.bf16.mxu0 %v1622
  %1853 = vmatmul.mubr.bf16.gmra.mxu0 %v1621
  %v1854 = vpop.f32.mrf.mxu0
  %v1855 = vadd.f32 %v1722, %v1854
  %v1856 = vpop.f32.mrf.mxu0
  %v1857 = vpop.f32.mrf.mxu0
  %v1858 = vadd.f32 %v1722, %v1857
  %v1859 = vpop.f32.mrf.mxu0
  %1860 = vmatprep.mubr.bf16.mxu0 %v1624
  %1861 = vmatmul.mubr.bf16.gmra.mxu0 %v1623
  %v1862 = vpop.f32.mrf.mxu0
  %v1863 = vadd.f32 %v1722, %v1862
  %v1864 = vpop.f32.mrf.mxu0
  %v1865 = vpop.f32.mrf.mxu0
  %v1866 = vadd.f32 %v1722, %v1865
  %v1867 = vpop.f32.mrf.mxu0
  %1868 = vmatprep.mubr.bf16.mxu0 %v1626
  %1869 = vmatmul.mubr.bf16.gmra.mxu0 %v1625
  %v1870 = vpop.f32.mrf.mxu0
  %v1871 = vadd.f32 %v1722, %v1870
  %v1872 = vpop.f32.mrf.mxu0
  %v1873 = vpop.f32.mrf.mxu0
  %v1874 = vadd.f32 %v1722, %v1873
  %v1875 = vpop.f32.mrf.mxu0
  %1876 = vmatprep.mubr.bf16.mxu0 %v1628
  %1877 = vmatmul.mubr.bf16.gmra.mxu0 %v1627
  %v1878 = vpop.f32.mrf.mxu0
  %v1879 = vadd.f32 %v1722, %v1878
  %v1880 = vpop.f32.mrf.mxu0
  %v1881 = vpop.f32.mrf.mxu0
  %v1882 = vadd.f32 %v1722, %v1881
  %v1883 = vpop.f32.mrf.mxu0
  %1884 = vmatprep.mubr.bf16.mxu0 %v1630
  %1885 = vmatmul.mubr.bf16.gmra.mxu0 %v1629
  %v1886 = vpop.f32.mrf.mxu0
  %v1887 = vadd.f32 %v1722, %v1886
  %v1888 = vpop.f32.mrf.mxu0
  %v1889 = vpop.f32.mrf.mxu0
  %v1890 = vadd.f32 %v1722, %v1889
  %v1891 = vpop.f32.mrf.mxu0
  %1892 = vmatprep.mubr.bf16.mxu0 %v1632
  %1893 = vmatmul.mubr.bf16.gmra.mxu0 %v1631
  %v1894 = vpop.f32.mrf.mxu0
  %v1895 = vadd.f32 %v1722, %v1894
  %v1896 = vpop.f32.mrf.mxu0
  %v1897 = vpop.f32.mrf.mxu0
  %v1898 = vadd.f32 %v1722, %v1897
  %v1899 = vpop.f32.mrf.mxu0
  %1900 = vmatprep.mubr.bf16.mxu0 %v1634
  %1901 = vmatmul.mubr.bf16.gmra.mxu0 %v1633
  %v1902 = vpop.f32.mrf.mxu0
  %v1903 = vadd.f32 %v1722, %v1902
  %v1904 = vpop.f32.mrf.mxu0
  %v1905 = vpop.f32.mrf.mxu0
  %v1906 = vadd.f32 %v1722, %v1905
  %v1907 = vpop.f32.mrf.mxu0
  %1908 = vmatprep.mubr.bf16.mxu0 %v1636
  %1909 = vmatmul.mubr.bf16.gmra.mxu0 %v1635
  %v1910 = vpop.f32.mrf.mxu0
  %v1911 = vadd.f32 %v1722, %v1910
  %v1912 = vpop.f32.mrf.mxu0
  %v1913 = vpop.f32.mrf.mxu0
  %v1914 = vadd.f32 %v1722, %v1913
  %v1915 = vpop.f32.mrf.mxu0
  %1916 = vmatprep.mubr.bf16.mxu0 %v1638
  %1917 = vmatmul.mubr.bf16.gmra.mxu0 %v1637
  %v1918 = vpop.f32.mrf.mxu0
  %v1919 = vadd.f32 %v1722, %v1918
  %v1920 = vpop.f32.mrf.mxu0
  %v1921 = vpop.f32.mrf.mxu0
  %v1922 = vadd.f32 %v1722, %v1921
  %v1923 = vpop.f32.mrf.mxu0
  %1924 = vmatprep.mubr.bf16.mxu0 %v1640
  %1925 = vmatmul.mubr.bf16.gmra.mxu0 %v1639
  %v1926 = vpop.f32.mrf.mxu0
  %v1927 = vadd.f32 %v1722, %v1926
  %v1928 = vpop.f32.mrf.mxu0
  %v1929 = vpop.f32.mrf.mxu0
  %v1930 = vadd.f32 %v1722, %v1929
  %v1931 = vpop.f32.mrf.mxu0
  %1932 = vmatprep.mubr.bf16.mxu0 %v1642
  %1933 = vmatmul.mubr.bf16.gmra.mxu0 %v1641
  %v1934 = vpop.f32.mrf.mxu0
  %v1935 = vadd.f32 %v1722, %v1934
  %v1936 = vpop.f32.mrf.mxu0
  %v1937 = vpop.f32.mrf.mxu0
  %v1938 = vadd.f32 %v1722, %v1937
  %v1939 = vpop.f32.mrf.mxu0
  %1940 = vmatprep.mubr.bf16.mxu0 %v1644
  %1941 = vmatmul.mubr.bf16.gmra.mxu0 %v1643
  %v1942 = vpop.f32.mrf.mxu0
  %v1943 = vadd.f32 %v1722, %v1942
  %v1944 = vpop.f32.mrf.mxu0
  %v1945 = vpop.f32.mrf.mxu0
  %v1946 = vadd.f32 %v1722, %v1945
  %v1947 = vpop.f32.mrf.mxu0
  %1948 = vmatprep.mubr.bf16.mxu0 %v1646
  %1949 = vmatmul.mubr.bf16.gmra.mxu0 %v1645
  %v1950 = vpop.f32.mrf.mxu0
  %v1951 = vadd.f32 %v1722, %v1950
  %v1952 = vpop.f32.mrf.mxu0
  %v1953 = vpop.f32.mrf.mxu0
  %v1954 = vadd.f32 %v1722, %v1953
  %v1955 = vpop.f32.mrf.mxu0
  %1956 = vmatprep.mubr.bf16.mxu0 %v1648
  %1957 = vmatmul.mubr.bf16.gmra.mxu0 %v1647
  %v1958 = vpop.f32.mrf.mxu0
  %v1959 = vadd.f32 %v1722, %v1958
  %v1960 = vpop.f32.mrf.mxu0
  %v1961 = vpop.f32.mrf.mxu0
  %v1962 = vadd.f32 %v1722, %v1961
  %v1963 = vpop.f32.mrf.mxu0
  %1964 = vmatprep.mubr.bf16.mxu0 %v1650
  %1965 = vmatmul.mubr.bf16.gmra.mxu0 %v1649
  %v1966 = vpop.f32.mrf.mxu0
  %v1967 = vadd.f32 %v1722, %v1966
  %v1968 = vpop.f32.mrf.mxu0
  %v1969 = vpop.f32.mrf.mxu0
  %v1970 = vadd.f32 %v1722, %v1969
  %v1971 = vpop.f32.mrf.mxu0
  %1972 = vmatprep.mubr.bf16.mxu0 %v1652
  %1973 = vmatmul.mubr.bf16.gmra.mxu0 %v1651
  %v1974 = vpop.f32.mrf.mxu0
  %v1975 = vadd.f32 %v1722, %v1974
  %v1976 = vpop.f32.mrf.mxu0
  %v1977 = vpop.f32.mrf.mxu0
  %v1978 = vadd.f32 %v1722, %v1977
  %v1979 = vpop.f32.mrf.mxu0
  %1980 = vmatprep.mubr.bf16.mxu0 %v1654
  %1981 = vmatmul.mubr.bf16.gmra.mxu0 %v1653
  %v1982 = vpop.f32.mrf.mxu0
  %v1983 = vadd.f32 %v1722, %v1982
  %v1984 = vpop.f32.mrf.mxu0
  %v1985 = vpop.f32.mrf.mxu0
  %v1986 = vadd.f32 %v1722, %v1985
  %v1987 = vpop.f32.mrf.mxu0
  %1988 = vmatprep.mubr.bf16.mxu0 %v1656
  %1989 = vmatmul.mubr.bf16.gmra.mxu0 %v1655
  %v1990 = vpop.f32.mrf.mxu0
  %v1991 = vadd.f32 %v1722, %v1990
  %v1992 = vpop.f32.mrf.mxu0
  %v1993 = vpop.f32.mrf.mxu0
  %v1994 = vadd.f32 %v1722, %v1993
  %v1995 = vpop.f32.mrf.mxu0
  %1996 = vmatprep.mubr.bf16.mxu0 %v1658
  %1997 = vmatmul.mubr.bf16.gmra.mxu0 %v1657
  %v1998 = vpop.f32.mrf.mxu0
  %v1999 = vadd.f32 %v1722, %v1998
  %v2000 = vpop.f32.mrf.mxu0
  %v2001 = vpop.f32.mrf.mxu0
  %v2002 = vadd.f32 %v1722, %v2001
  %v2003 = vpop.f32.mrf.mxu0
  %2004 = vmatprep.mubr.bf16.mxu0 %v1660
  %2005 = vmatmul.mubr.bf16.gmra.mxu0 %v1659
  %v2006 = vpop.f32.mrf.mxu0
  %v2007 = vadd.f32 %v1722, %v2006
  %v2008 = vpop.f32.mrf.mxu0
  %v2009 = vpop.f32.mrf.mxu0
  %v2010 = vadd.f32 %v1722, %v2009
  %v2011 = vpop.f32.mrf.mxu0
  %2012 = vmatprep.mubr.bf16.mxu0 %v1662
  %2013 = vmatmul.mubr.bf16.gmra.mxu0 %v1661
  %v2014 = vpop.f32.mrf.mxu0
  %v2015 = vadd.f32 %v1722, %v2014
  %v2016 = vpop.f32.mrf.mxu0
  %v2017 = vpop.f32.mrf.mxu0
  %v2018 = vadd.f32 %v1722, %v2017
  %v2019 = vpop.f32.mrf.mxu0
  %2020 = vmatprep.mubr.bf16.mxu0 %v1664
  %2021 = vmatmul.mubr.bf16.gmra.mxu0 %v1663
  %v2022 = vpop.f32.mrf.mxu0
  %v2023 = vadd.f32 %v1722, %v2022
  %v2024 = vpop.f32.mrf.mxu0
  %v2025 = vpop.f32.mrf.mxu0
  %v2026 = vadd.f32 %v1722, %v2025
  %v2027 = vpop.f32.mrf.mxu0
  %2028 = vmatprep.mubr.bf16.mxu0 %v1666
  %2029 = vmatmul.mubr.bf16.gmra.mxu0 %v1665
  %v2030 = vpop.f32.mrf.mxu0
  %v2031 = vadd.f32 %v1722, %v2030
  %v2032 = vpop.f32.mrf.mxu0
  %v2033 = vpop.f32.mrf.mxu0
  %v2034 = vadd.f32 %v1722, %v2033
  %v2035 = vpop.f32.mrf.mxu0
  %2036 = vmatprep.mubr.bf16.mxu0 %v1668
  %2037 = vmatmul.mubr.bf16.gmra.mxu0 %v1667
  %v2038 = vpop.f32.mrf.mxu0
  %v2039 = vadd.f32 %v1722, %v2038
  %v2040 = vpop.f32.mrf.mxu0
  %v2041 = vpop.f32.mrf.mxu0
  %v2042 = vadd.f32 %v1722, %v2041
  %v2043 = vpop.f32.mrf.mxu0
  %2044 = vmatprep.mubr.bf16.mxu0 %v1670
  %2045 = vmatmul.mubr.bf16.gmra.mxu0 %v1669
  %v2046 = vpop.f32.mrf.mxu0
  %v2047 = vadd.f32 %v1722, %v2046
  %v2048 = vpop.f32.mrf.mxu0
  %v2049 = vpop.f32.mrf.mxu0
  %v2050 = vadd.f32 %v1722, %v2049
  %v2051 = vpop.f32.mrf.mxu0
  %2052 = vmatprep.mubr.bf16.mxu0 %v1672
  %2053 = vmatmul.mubr.bf16.gmra.mxu0 %v1671
  %v2054 = vpop.f32.mrf.mxu0
  %v2055 = vadd.f32 %v1722, %v2054
  %v2056 = vpop.f32.mrf.mxu0
  %v2057 = vpop.f32.mrf.mxu0
  %v2058 = vadd.f32 %v1722, %v2057
  %v2059 = vpop.f32.mrf.mxu0
  %2060 = vmatprep.mubr.bf16.mxu0 %v1674
  %2061 = vmatmul.mubr.bf16.gmra.mxu0 %v1673
  %v2062 = vpop.f32.mrf.mxu0
  %v2063 = vadd.f32 %v1722, %v2062
  %v2064 = vpop.f32.mrf.mxu0
  %v2065 = vpop.f32.mrf.mxu0
  %v2066 = vadd.f32 %v1722, %v2065
  %v2067 = vpop.f32.mrf.mxu0
  %2068 = vmatprep.mubr.bf16.mxu0 %v1676
  %2069 = vmatmul.mubr.bf16.gmra.mxu0 %v1675
  %v2070 = vpop.f32.mrf.mxu0
  %v2071 = vadd.f32 %v1722, %v2070
  %v2072 = vpop.f32.mrf.mxu0
  %v2073 = vpop.f32.mrf.mxu0
  %v2074 = vadd.f32 %v1722, %v2073
  %v2075 = vpop.f32.mrf.mxu0
  %2076 = vmatprep.mubr.bf16.mxu0 %v1678
  %2077 = vmatmul.mubr.bf16.gmra.mxu0 %v1677
  %v2078 = vpop.f32.mrf.mxu0
  %v2079 = vadd.f32 %v1722, %v2078
  %v2080 = vpop.f32.mrf.mxu0
  %v2081 = vpop.f32.mrf.mxu0
  %v2082 = vadd.f32 %v1722, %v2081
  %v2083 = vpop.f32.mrf.mxu0
  %2084 = vmatprep.mubr.bf16.mxu0 %v1680
  %2085 = vmatmul.mubr.bf16.gmra.mxu0 %v1679
  %v2086 = vpop.f32.mrf.mxu0
  %v2087 = vadd.f32 %v1722, %v2086
  %v2088 = vpop.f32.mrf.mxu0
  %v2089 = vpop.f32.mrf.mxu0
  %v2090 = vadd.f32 %v1722, %v2089
  %v2091 = vpop.f32.mrf.mxu0
  %2092 = vmatprep.mubr.bf16.mxu0 %v1682
  %2093 = vmatmul.mubr.bf16.gmra.mxu0 %v1681
  %v2094 = vpop.f32.mrf.mxu0
  %v2095 = vadd.f32 %v1722, %v2094
  %v2096 = vpop.f32.mrf.mxu0
  %v2097 = vpop.f32.mrf.mxu0
  %v2098 = vadd.f32 %v1722, %v2097
  %v2099 = vpop.f32.mrf.mxu0
  %2100 = vmatprep.mubr.bf16.mxu0 %v1684
  %2101 = vmatmul.mubr.bf16.gmra.mxu0 %v1683
  %v2102 = vpop.f32.mrf.mxu0
  %v2103 = vadd.f32 %v1722, %v2102
  %v2104 = vpop.f32.mrf.mxu0
  %v2105 = vpop.f32.mrf.mxu0
  %v2106 = vadd.f32 %v1722, %v2105
  %v2107 = vpop.f32.mrf.mxu0
  %2108 = vdwg.mxu0
  %2109 = vst [vmem:[%s7] sm:$0xff] %v1855
  %2110 = vst [vmem:[%s7 + $0x8] sm:$0xff] %v1858
  %2111 = vst [vmem:[%s7 + $0x10] sm:$0xff] %v1863
  %2112 = vst [vmem:[%s7 + $0x18] sm:$0xff] %v1866
  %2113 = vst [vmem:[%s7 + $0x20] sm:$0xff] %v1871
  %2114 = vst [vmem:[%s7 + $0x28] sm:$0xff] %v1874
  %2115 = vst [vmem:[%s7 + $0x30] sm:$0xff] %v1879
  %2116 = vst [vmem:[%s7 + $0x38] sm:$0xff] %v1882
  %2117 = vst [vmem:[%s7 + $0x40] sm:$0xff] %v1887
  %2118 = vst [vmem:[%s7 + $0x48] sm:$0xff] %v1890
  %2119 = vst [vmem:[%s7 + $0x50] sm:$0xff] %v1895
  %2120 = vst [vmem:[%s7 + $0x58] sm:$0xff] %v1898
  %2121 = vst [vmem:[%s7 + $0x60] sm:$0xff] %v1903
  %2122 = vst [vmem:[%s7 + $0x68] sm:$0xff] %v1906
  %2123 = vst [vmem:[%s7 + $0x70] sm:$0xff] %v1911
  %2124 = vst [vmem:[%s7 + $0x78] sm:$0xff] %v1914
  %2125 = vst [vmem:[%s7 + $0x80] sm:$0xff] %v1919
  %2126 = vst [vmem:[%s7 + $0x88] sm:$0xff] %v1922
  %2127 = vst [vmem:[%s7 + $0x90] sm:$0xff] %v1927
  %2128 = vst [vmem:[%s7 + $0x98] sm:$0xff] %v1930
  %2129 = vst [vmem:[%s7 + $0xa0] sm:$0xff] %v1935
  %2130 = vst [vmem:[%s7 + $0xa8] sm:$0xff] %v1938
  %2131 = vst [vmem:[%s7 + $0xb0] sm:$0xff] %v1943
  %2132 = vst [vmem:[%s7 + $0xb8] sm:$0xff] %v1946
  %2133 = vst [vmem:[%s7 + $0xc0] sm:$0xff] %v1951
  %2134 = vst [vmem:[%s7 + $0xc8] sm:$0xff] %v1954
  %2135 = vst [vmem:[%s7 + $0xd0] sm:$0xff] %v1959
  %2136 = vst [vmem:[%s7 + $0xd8] sm:$0xff] %v1962
  %2137 = vst [vmem:[%s7 + $0xe0] sm:$0xff] %v1967
  %2138 = vst [vmem:[%s7 + $0xe8] sm:$0xff] %v1970
  %2139 = vst [vmem:[%s7 + $0xf0] sm:$0xff] %v1975
  %2140 = vst [vmem:[%s7 + $0xf8] sm:$0xff] %v1978
  %2141 = vst [vmem:[%s7 + $0x100] sm:$0xff] %v1983
  %2142 = vst [vmem:[%s7 + $0x108] sm:$0xff] %v1986
  %2143 = vst [vmem:[%s7 + $0x110] sm:$0xff] %v1991
  %2144 = vst [vmem:[%s7 + $0x118] sm:$0xff] %v1994
  %2145 = vst [vmem:[%s7 + $0x120] sm:$0xff] %v1999
  %2146 = vst [vmem:[%s7 + $0x128] sm:$0xff] %v2002
  %2147 = vst [vmem:[%s7 + $0x130] sm:$0xff] %v2007
  %2148 = vst [vmem:[%s7 + $0x138] sm:$0xff] %v2010
  %2149 = vst [vmem:[%s7 + $0x140] sm:$0xff] %v2015
  %2150 = vst [vmem:[%s7 + $0x148] sm:$0xff] %v2018
  %2151 = vst [vmem:[%s7 + $0x150] sm:$0xff] %v2023
  %2152 = vst [vmem:[%s7 + $0x158] sm:$0xff] %v2026
  %2153 = vst [vmem:[%s7 + $0x160] sm:$0xff] %v2031
  %2154 = vst [vmem:[%s7 + $0x168] sm:$0xff] %v2034
  %2155 = vst [vmem:[%s7 + $0x170] sm:$0xff] %v2039
  %2156 = vst [vmem:[%s7 + $0x178] sm:$0xff] %v2042
  %2157 = vst [vmem:[%s7 + $0x180] sm:$0xff] %v2047
  %2158 = vst [vmem:[%s7 + $0x188] sm:$0xff] %v2050
  %2159 = vst [vmem:[%s7 + $0x190] sm:$0xff] %v2055
  %2160 = vst [vmem:[%s7 + $0x198] sm:$0xff] %v2058
  %2161 = vst [vmem:[%s7 + $0x1a0] sm:$0xff] %v2063
  %2162 = vst [vmem:[%s7 + $0x1a8] sm:$0xff] %v2066
  %2163 = vst [vmem:[%s7 + $0x1b0] sm:$0xff] %v2071
  %2164 = vst [vmem:[%s7 + $0x1b8] sm:$0xff] %v2074
  %2165 = vst [vmem:[%s7 + $0x1c0] sm:$0xff] %v2079
  %2166 = vst [vmem:[%s7 + $0x1c8] sm:$0xff] %v2082
  %2167 = vst [vmem:[%s7 + $0x1d0] sm:$0xff] %v2087
  %2168 = vst [vmem:[%s7 + $0x1d8] sm:$0xff] %v2090
  %2169 = vst [vmem:[%s7 + $0x1e0] sm:$0xff] %v2095
  %2170 = vst [vmem:[%s7 + $0x1e8] sm:$0xff] %v2098
  %2171 = vst [vmem:[%s7 + $0x1f0] sm:$0xff] %v2103
  %2172 = vst [vmem:[%s7 + $0x1f8] sm:$0xff] %v2106
  // Predicated region
  $region30: #{mlp_forward.1} parent=0 // pred_check
    _
  $region31: #{mlp_forward.1} parent=0 // pred_check_branch
    %2174 = sbr.rel (0) target = $region33
  $region32: #{mlp_forward.1} parent=0 // pred_region
    _
  $region33: #{mlp_forward.1} parent=0 // pred_fallthru
    _
  // Predicated region
  $region34: #{mlp_forward.1} parent=0 // pred_check
    _
  $region35: #{mlp_forward.1} parent=0 // pred_check_branch
    %2176 = sbr.rel (0) target = $region37
  $region36: #{mlp_forward.1} parent=0 // pred_region
    _
  $region37: #{mlp_forward.1} parent=0 // pred_fallthru
    _

</llo_original>
